<compile_context>
chip_gen: v7x
topology: tpu7x:2x2x1
jax: 0.10.0
libtpu: 0.0.40
codegen_flags: <defaults>
</compile_context>

<pallas_src>
import functools

import jax
import jax.numpy as jnp
from jax.experimental import pallas as pl
from jax.experimental.pallas import tpu as pltpu

LN_EPS = 1e-5


# ----------------------------- in-kernel helpers -----------------------------

def _layer_norm(x, g):
    mu = jnp.mean(x, axis=-1, keepdims=True)
    var = jnp.mean(jnp.square(x - mu), axis=-1, keepdims=True)
    return (x - mu) * jax.lax.rsqrt(var + LN_EPS) * g


def _gelu(x):
    # TODO(synk): PyTorch nn.GELU() default is exact (erf); tanh approximation used here.
    c = jnp.float32(0.7978845608028654)  # sqrt(2/pi)
    return 0.5 * x * (1.0 + jnp.tanh(c * (x + 0.044715 * x * x * x)))


# --------------------------------- fused kernel -------------------------------

def fused_layer_kernel(x_ref, tgt_ref, pos_ref, w_in_ref,
                       ln1_ref, wqkv_ref, wo_ref, ln2_ref, wff1_ref, wff2_ref,
                       lnf_ref, w_out_ref,
                       loss_ref, h_ref, ctx_ref, *, heads, dim_head):
    """One (batch block, layer) grid step of the fused forward + MSE loss.

    x_ref (N,Din) bf16   tgt_ref (N,Dout) f32   pos_ref (N,D) f32
    w_in (Din,D) bf16    lnf (1,D) f32          w_out (D,Dout) bf16
    per-layer blocks (leading depth dim == 1):
      ln1/ln2 (1,1,D) f32, wqkv (1,D,3*inner) bf16, wo (1,inner,D) bf16,
      wff1 (1,D,FF) bf16, wff2 (1,FF,D) bf16
    loss_ref (1,1,1) f32   partial sum of squared error for this batch block
    h_ref    (N,D)  f32    VMEM hidden-state accumulator (carried over depth)
    ctx_ref  (N,inner) f32 VMEM per-head attention-context staging buffer
    """
    l = pl.program_id(1)
    depth = pl.num_programs(1)
    n = x_ref.shape[0]
    inner = heads * dim_head
    scale = jnp.float32(dim_head ** -0.5)

    # ---- first layer only: project_in (no bias) + AbsolutePositionalEmbedding
    @pl.when(l == 0)
    def _():
        h_ref[...] = (jnp.dot(x_ref[...], w_in_ref[...],
                              preferred_element_type=jnp.float32)
                      + pos_ref[...])

    h = h_ref[...]                                                   # (N, D) f32

    # causal mask shared by all heads: single (N, N), no per-batch copy
    row = jax.lax.broadcasted_iota(jnp.int32, (n, n), 0)
    col = jax.lax.broadcasted_iota(jnp.int32, (n, n), 1)
    causal = row >= col

    # ---------------- pre-norm causal multi-head attention ----------------
    a_in = _layer_norm(h, ln1_ref[0]).astype(jnp.bfloat16)
    qkv = jnp.dot(a_in, wqkv_ref[0],
                  preferred_element_type=jnp.float32)                # (N, 3*inner)

    for hh in range(heads):
        lo = hh * dim_head
        q = (qkv[:, lo:lo + dim_head] * scale).astype(jnp.bfloat16)  # (N, dh)
        k = qkv[:, inner + lo:inner + lo + dim_head].astype(jnp.bfloat16)
        v = qkv[:, 2 * inner + lo:2 * inner + lo + dim_head].astype(jnp.bfloat16)

        s = jnp.einsum('nd,md->nm', q, k,
                       preferred_element_type=jnp.float32)           # (N, N) f32
        s = jnp.where(causal, s, jnp.float32(-1e30))
        s = s - jnp.max(s, axis=-1, keepdims=True)
        p = jnp.exp(s)
        p = p * pl.reciprocal(jnp.sum(p, axis=-1, keepdims=True), approx=True)
        ctx_ref[:, lo:lo + dim_head] = jnp.dot(
            p.astype(jnp.bfloat16), v, preferred_element_type=jnp.float32)

    # ONE output projection across all heads + ONE residual add
    h = h + jnp.dot(ctx_ref[...].astype(jnp.bfloat16), wo_ref[0],
                    preferred_element_type=jnp.float32)

    # -------------------------- pre-norm feed-forward ---------------------
    f_in = _layer_norm(h, ln2_ref[0]).astype(jnp.bfloat16)
    f = _gelu(jnp.dot(f_in, wff1_ref[0], preferred_element_type=jnp.float32))
    h = h + jnp.dot(f.astype(jnp.bfloat16), wff2_ref[0],
                    preferred_element_type=jnp.float32)
    h_ref[...] = h

    # ---- last layer only: final LayerNorm + project_out + partial sq. error
    @pl.when(l == depth - 1)
    def _():
        out = jnp.dot(_layer_norm(h, lnf_ref[...]).astype(jnp.bfloat16),
                      w_out_ref[...], preferred_element_type=jnp.float32)  # (N, Dout)
        d = out - tgt_ref[...]
        loss_ref[0] = jnp.sum(d * d, keepdims=True)

    # TODO(synk): for long sequences, tile the KV axis with an online-softmax
    # accumulator (flash pattern) so attention VMEM is independent of N^2.


# ------------------------------ pallas wrapper ---------------------------------

def _vmem_limit_bytes():
    # Derive a VMEM budget from the actual chip (v7x: 64 MiB, v5e/v6e: 128 MiB),
    # leaving headroom; fall back conservatively if the query is unavailable.
    try:
        cap = int(pltpu.get_tpu_info().vmem_capacity_bytes)
    except Exception:
        cap = 64 * 1024 * 1024
    return min(int(cap * 3 // 4), 96 * 1024 * 1024)


def continuous_ar_forward(x, params):
    """ContinuousAutoregressiveWrapper.forward with rollout_steps=1, no mask/lens."""
    B, n_total, dim_in = x.shape
    N = n_total - 1

    dim = params["w_in"].shape[1]
    dim_out = params["w_out"].shape[1]
    depth, _, qkv_cols = params["w_qkv"].shape
    inner = params["w_o"].shape[1]
    ff = params["w_ff1"].shape[2]
    heads, dim_head = params["heads"], params["dim_head"]

    # wrapper-level slicing: inp = x[:, :-1], target = x[:, 1:]
    inp = x[:, :-1].reshape(B * N, dim_in).astype(jnp.bfloat16)
    tgt = x[:, 1:].reshape(B * N, dim_in)                    # f32 MSE target
    pos = params["pos_emb"][:N]                              # (N, D), no B tiling

    kernel = functools.partial(fused_layer_kernel, heads=heads, dim_head=dim_head)

    per_layer = lambda b, l: (l, 0, 0)   # stream layer l's weights (double-buffered)
    shared = lambda b, l: (0, 0)         # depth-invariant weights stay resident
    per_batch = lambda b, l: (b, 0)      # one sequence per batch block

    partial_sq = pl.pallas_call(
        kernel,
        out_shape=jax.ShapeDtypeStruct((B, 1, 1), jnp.float32),
        grid_spec=pltpu.PrefetchScalarGridSpec(
            num_scalar_prefetch=0,
            grid=(B, depth),
            in_specs=[
                pl.BlockSpec((N, dim_in), per_batch),            # inp (bf16)
                pl.BlockSpec((N, dim_out), per_batch),           # target (f32)
                pl.BlockSpec((N, dim), shared),                  # pos_emb
                pl.BlockSpec((dim_in, dim), shared),             # w_in
                pl.BlockSpec((1, 1, dim), per_layer),            # ln1 gamma
                pl.BlockSpec((1, dim, qkv_cols), per_layer),     # w_qkv
                pl.BlockSpec((1, inner, dim), per_layer),        # w_o
                pl.BlockSpec((1, 1, dim), per_layer),            # ln2 gamma
                pl.BlockSpec((1, dim, ff), per_layer),           # w_ff1
                pl.BlockSpec((1, ff, dim), per_layer),           # w_ff2
                pl.BlockSpec((1, dim), shared),                  # final ln gamma
                pl.BlockSpec((dim, dim_out), shared),            # w_out
            ],
            out_specs=pl.BlockSpec((1, 1, 1), lambda b, l: (b, 0, 0)),
            scratch_shapes=[pltpu.VMEM((N, dim), jnp.float32),       # hidden state
                            pltpu.VMEM((N, inner), jnp.float32)]),   # per-head ctx
        compiler_params=pltpu.CompilerParams(
            dimension_semantics=("parallel", "arbitrary"),
            vmem_limit_bytes=_vmem_limit_bytes()),
    )(inp, tgt, pos,
      params["w_in"], params["ln1_g"], params["w_qkv"], params["w_o"],
      params["ln2_g"], params["w_ff1"], params["w_ff2"],
      params["final_ln_g"], params["w_out"])

    # finish nn.MSELoss(reduction='none').mean(): sum of per-block partial
    # squared-error sums divided by the total element count.
    return jnp.sum(partial_sq) / (B * N * dim_out)


# TODO(synk): generate() / forward_rollout() (KV-cache decode loop, probabilistic
# sampling) and masked/lens loss variants are not implemented here.


# ------------------------------- param init -----------------------------------

def init_params(key, *, dim_in, dim, dim_out, depth, heads, dim_head, ff_mult,
                max_seq_len):
    inner = heads * dim_head
    ff = ff_mult * dim
    ks = jax.random.split(key, 7)

    def nrm(k, shape, std, dtype=jnp.bfloat16):
        return (jax.random.normal(k, shape, jnp.float32) * std).astype(dtype)

    return {
        "heads": heads,
        "dim_head": dim_head,
        # matmul weights stored bf16 (half the HBM DMA / VMEM footprint,
        # bf16-native MXU on v6e/v7x); norms / pos-emb kept f32.
        "w_in": nrm(ks[0], (dim_in, dim), dim_in ** -0.5),
        # AbsolutePositionalEmbedding: embedding table * dim**-0.5
        "pos_emb": nrm(ks[1], (max_seq_len, dim), 0.02 * dim ** -0.5, jnp.float32),
        "final_ln_g": jnp.ones((1, dim), jnp.float32),
        "w_out": nrm(ks[2], (dim, dim_out), dim ** -0.5),
        # per-layer parameters, stacked along depth (streamed by the grid)
        "ln1_g": jnp.ones((depth, 1, dim), jnp.float32),
        "w_qkv": nrm(ks[3], (depth, dim, 3 * inner), dim ** -0.5),
        "w_o": nrm(ks[4], (depth, inner, dim), inner ** -0.5),
        "ln2_g": jnp.ones((depth, 1, dim), jnp.float32),
        "w_ff1": nrm(ks[5], (depth, dim, ff), dim ** -0.5),
        "w_ff2": nrm(ks[6], (depth, ff, dim), ff ** -0.5),
    }


# ----------------------------------- main --------------------------------------

if __name__ == "__main__":
    key = jax.random.PRNGKey(0)
    k_param, k_x = jax.random.split(key)

    B, N_total = 2, 9                 # inp / target sequence length = 8
    dim_in = dim_out = 4
    dim, depth, heads, dim_head, ff_mult = 32, 2, 4, 8, 4
    max_seq_len = N_total - 1

    params = init_params(
        k_param, dim_in=dim_in, dim=dim, dim_out=dim_out, depth=depth,
        heads=heads, dim_head=dim_head, ff_mult=ff_mult, max_seq_len=max_seq_len)

    x = jax.random.normal(k_x, (B, N_total, dim_in), jnp.float32)

    loss = continuous_ar_forward(x, params)
    loss = jax.block_until_ready(loss)
    assert loss.shape == () and bool(jnp.isfinite(loss))
    print("KERNEL_OK")
</pallas_src>

<mosaic_0001>
module attributes {stable_mosaic.version = 11 : i64} {
  func.func @fused_layer_kernel(%arg0: i32, %arg1: i32, %arg2: memref<8x4xbf16, #tpu.memory_space<vmem>>, %arg3: memref<8x4xf32, #tpu.memory_space<vmem>>, %arg4: memref<8x32xf32, #tpu.memory_space<vmem>>, %arg5: memref<4x32xbf16, #tpu.memory_space<vmem>>, %arg6: memref<1x1x32xf32, #tpu.memory_space<vmem>>, %arg7: memref<1x32x96xbf16, #tpu.memory_space<vmem>>, %arg8: memref<1x32x32xbf16, #tpu.memory_space<vmem>>, %arg9: memref<1x1x32xf32, #tpu.memory_space<vmem>>, %arg10: memref<1x32x128xbf16, #tpu.memory_space<vmem>>, %arg11: memref<1x128x32xbf16, #tpu.memory_space<vmem>>, %arg12: memref<1x32xf32, #tpu.memory_space<vmem>>, %arg13: memref<32x4xbf16, #tpu.memory_space<vmem>>, %arg14: memref<1x1x1xf32, #tpu.memory_space<vmem>>, %arg15: memref<8x32xf32, #tpu.memory_space<vmem>>, %arg16: memref<8x32xf32, #tpu.memory_space<vmem>>) attributes {dimension_semantics = [#tpu.dimension_semantics<parallel>, #tpu.dimension_semantics<arbitrary>], iteration_bounds = array<i64: 2, 2>, scalar_prefetch = 0 : i64, scratch_operands = 2 : i64, tpu.core_type = #tpu.core_type<tc>, window_params = [{transform_indices = @transform_0, window_bounds = array<i64: 8, 4>}, {transform_indices = @transform_1, window_bounds = array<i64: 8, 4>}, {pipeline_mode = #tpu.pipeline_mode<synchronous>, transform_indices = @transform_2, window_bounds = array<i64: 8, 32>}, {pipeline_mode = #tpu.pipeline_mode<synchronous>, transform_indices = @transform_3, window_bounds = array<i64: 4, 32>}, {transform_indices = @transform_4, window_bounds = array<i64: 1, 1, 32>}, {transform_indices = @transform_5, window_bounds = array<i64: 1, 32, 96>}, {transform_indices = @transform_6, window_bounds = array<i64: 1, 32, 32>}, {transform_indices = @transform_7, window_bounds = array<i64: 1, 1, 32>}, {transform_indices = @transform_8, window_bounds = array<i64: 1, 32, 128>}, {transform_indices = @transform_9, window_bounds = array<i64: 1, 128, 32>}, {pipeline_mode = #tpu.pipeline_mode<synchronous>, transform_indices = @transform_10, window_bounds = array<i64: 1, 32>}, {pipeline_mode = #tpu.pipeline_mode<synchronous>, transform_indices = @transform_11, window_bounds = array<i64: 32, 4>}, {transform_indices = @transform_12, window_bounds = array<i64: 1, 1, 1>}]} {
    %c0_i32 = arith.constant 0 : i32
    %0 = arith.cmpi eq, %arg1, %c0_i32 : i32
    %1 = arith.extui %0 : i1 to i32
    %c0_i32_0 = arith.constant 0 : i32
    %2 = arith.cmpi ne, %1, %c0_i32_0 : i32
    scf.if %2 {
      %c0_71 = arith.constant 0 : index
      %c0_72 = arith.constant 0 : index
      %183 = vector.load %arg2[%c0_71, %c0_72] : memref<8x4xbf16, #tpu.memory_space<vmem>>, vector<8x4xbf16>
      %c0_73 = arith.constant 0 : index
      %c0_74 = arith.constant 0 : index
      %184 = vector.load %arg5[%c0_73, %c0_74] : memref<4x32xbf16, #tpu.memory_space<vmem>>, vector<4x32xbf16>
      %cst_75 = arith.constant dense<0.000000e+00> : vector<8x32xf32>
      %185 = tpu.matmul %183, %184, %cst_75 {dimension_numbers = #tpu.dot_dimension_numbers<[1], [0], [0], [1], [0, 0, 1, 1], [], []>} : vector<8x4xbf16>, vector<4x32xbf16>, vector<8x32xf32> -> vector<8x32xf32>
      %c0_76 = arith.constant 0 : index
      %c0_77 = arith.constant 0 : index
      %186 = vector.load %arg4[%c0_76, %c0_77] : memref<8x32xf32, #tpu.memory_space<vmem>>, vector<8x32xf32>
      %187 = arith.addf %185, %186 : vector<8x32xf32>
      %c0_78 = arith.constant 0 : index
      %c0_79 = arith.constant 0 : index
      %188 = vector.load %arg15[%c0_78, %c0_79] : memref<8x32xf32, #tpu.memory_space<vmem>>, vector<8x32xf32>
      tpu.vector_store %arg15[%c0_78, %c0_79], %187 {strides = array<i32>} : memref<8x32xf32, #tpu.memory_space<vmem>>, vector<8x32xf32>,
    } else {
    }
    %c0 = arith.constant 0 : index
    %c0_1 = arith.constant 0 : index
    %3 = vector.load %arg15[%c0, %c0_1] : memref<8x32xf32, #tpu.memory_space<vmem>>, vector<8x32xf32>
    %4 = tpu.iota {dimensions = array<i32: 0>} : vector<8x8xi32>
    %5 = tpu.iota {dimensions = array<i32: 1>} : vector<8x8xi32>
    %6 = arith.cmpi sge, %4, %5 : vector<8x8xi32>
    %c0_2 = arith.constant 0 : index
    %c0_3 = arith.constant 0 : index
    %c0_4 = arith.constant 0 : index
    %7 = vector.load %arg6[%c0_2, %c0_3, %c0_4] : memref<1x1x32xf32, #tpu.memory_space<vmem>>, vector<1x1x32xf32>
    %8 = vector.shape_cast %7 : vector<1x1x32xf32> to vector<1x32xf32>
    %cst = arith.constant dense<0.000000e+00> : vector<8xf32>
    %9 = vector.multi_reduction <add>, %3, %cst [1] : vector<8x32xf32> to vector<8xf32>
    %10 = vector.shape_cast %9 : vector<8xf32> to vector<8x1xf32>
    %cst_5 = arith.constant 3.200000e+01 : f32
    %11 = vector.broadcast %cst_5 : f32 to vector<8x1xf32>
    %12 = arith.divf %10, %11 : vector<8x1xf32>
    %13 = vector.broadcast %12 : vector<8x1xf32> to vector<8x32xf32>
    %14 = arith.subf %3, %13 : vector<8x32xf32>
    %15 = arith.mulf %14, %14 : vector<8x32xf32>
    %cst_6 = arith.constant dense<0.000000e+00> : vector<8xf32>
    %16 = vector.multi_reduction <add>, %15, %cst_6 [1] : vector<8x32xf32> to vector<8xf32>
    %17 = vector.shape_cast %16 : vector<8xf32> to vector<8x1xf32>
    %cst_7 = arith.constant 3.200000e+01 : f32
    %18 = vector.broadcast %cst_7 : f32 to vector<8x1xf32>
    %19 = arith.divf %17, %18 : vector<8x1xf32>
    %20 = vector.broadcast %12 : vector<8x1xf32> to vector<8x32xf32>
    %21 = arith.subf %3, %20 : vector<8x32xf32>
    %cst_8 = arith.constant 9.99999974E-6 : f32
    %22 = vector.broadcast %cst_8 : f32 to vector<8x1xf32>
    %23 = arith.addf %19, %22 : vector<8x1xf32>
    %24 = math.rsqrt %23 : vector<8x1xf32>
    %25 = vector.broadcast %24 : vector<8x1xf32> to vector<8x32xf32>
    %26 = arith.mulf %21, %25 : vector<8x32xf32>
    %27 = vector.broadcast %8 : vector<1x32xf32> to vector<8x32xf32>
    %28 = arith.mulf %26, %27 : vector<8x32xf32>
    %29 = arith.truncf %28 : vector<8x32xf32> to vector<8x32xbf16>
    %c0_9 = arith.constant 0 : index
    %c0_10 = arith.constant 0 : index
    %c0_11 = arith.constant 0 : index
    %30 = vector.load %arg7[%c0_9, %c0_10, %c0_11] : memref<1x32x96xbf16, #tpu.memory_space<vmem>>, vector<1x32x96xbf16>
    %31 = vector.shape_cast %30 : vector<1x32x96xbf16> to vector<32x96xbf16>
    %cst_12 = arith.constant dense<0.000000e+00> : vector<8x96xf32>
    %32 = tpu.matmul %29, %31, %cst_12 {dimension_numbers = #tpu.dot_dimension_numbers<[1], [0], [0], [1], [0, 0, 1, 1], [], []>} : vector<8x32xbf16>, vector<32x96xbf16>, vector<8x96xf32> -> vector<8x96xf32>
    %33 = vector.extract_strided_slice %32 {offsets = [0, 0], sizes = [8, 8], strides = [1, 1]} : vector<8x96xf32> to vector<8x8xf32>
    %cst_13 = arith.constant 0.353553385 : f32
    %34 = vector.broadcast %cst_13 : f32 to vector<8x8xf32>
    %35 = arith.mulf %33, %34 : vector<8x8xf32>
    %36 = arith.truncf %35 : vector<8x8xf32> to vector<8x8xbf16>
    %37 = vector.extract_strided_slice %32 {offsets = [0, 32], sizes = [8, 8], strides = [1, 1]} : vector<8x96xf32> to vector<8x8xf32>
    %38 = arith.truncf %37 : vector<8x8xf32> to vector<8x8xbf16>
    %39 = vector.extract_strided_slice %32 {offsets = [0, 64], sizes = [8, 8], strides = [1, 1]} : vector<8x96xf32> to vector<8x8xf32>
    %40 = arith.truncf %39 : vector<8x8xf32> to vector<8x8xbf16>
    "tpu.trace_start"() <{level = 10 : i32, message = "nd,md->nm"}> : () -> ()
    %cst_14 = arith.constant dense<0.000000e+00> : vector<8x8xf32>
    %41 = tpu.matmul %36, %38, %cst_14 {dimension_numbers = #tpu.dot_dimension_numbers<[1], [1], [0], [0], [0, 0, 1, 0], [], []>} : vector<8x8xbf16>, vector<8x8xbf16>, vector<8x8xf32> -> vector<8x8xf32>
    %cst_15 = arith.constant -1.000000e+30 : f32
    "tpu.trace_stop"() : () -> ()
    %42 = vector.broadcast %cst_15 : f32 to vector<8x8xf32>
    %43 = arith.select %6, %41, %42 : vector<8x8xi1>, vector<8x8xf32>
    %cst_16 = arith.constant dense<0xFF800000> : vector<8xf32>
    %44 = vector.multi_reduction <maximumf>, %43, %cst_16 [1] : vector<8x8xf32> to vector<8xf32>
    %45 = vector.shape_cast %44 : vector<8xf32> to vector<8x1xf32>
    %46 = vector.broadcast %45 : vector<8x1xf32> to vector<8x8xf32>
    %47 = arith.subf %43, %46 : vector<8x8xf32>
    %48 = math.exp %47 : vector<8x8xf32>
    %cst_17 = arith.constant dense<0.000000e+00> : vector<8xf32>
    %49 = vector.multi_reduction <add>, %48, %cst_17 [1] : vector<8x8xf32> to vector<8xf32>
    %50 = vector.shape_cast %49 : vector<8xf32> to vector<8x1xf32>
    %51 = tpu.reciprocal %50 {approx = true} : vector<8x1xf32> -> vector<8x1xf32>
    %52 = vector.broadcast %51 : vector<8x1xf32> to vector<8x8xf32>
    %53 = arith.mulf %48, %52 : vector<8x8xf32>
    %54 = arith.truncf %53 : vector<8x8xf32> to vector<8x8xbf16>
    %cst_18 = arith.constant dense<0.000000e+00> : vector<8x8xf32>
    %55 = tpu.matmul %54, %40, %cst_18 {dimension_numbers = #tpu.dot_dimension_numbers<[1], [0], [0], [1], [0, 0, 1, 1], [], []>} : vector<8x8xbf16>, vector<8x8xbf16>, vector<8x8xf32> -> vector<8x8xf32>
    %c0_19 = arith.constant 0 : index
    %c0_20 = arith.constant 0 : index
    %56 = vector.load %arg16[%c0_19, %c0_20] : memref<8x32xf32, #tpu.memory_space<vmem>>, vector<8x8xf32>
    tpu.vector_store %arg16[%c0_19, %c0_20], %55 {strides = array<i32>} : memref<8x32xf32, #tpu.memory_space<vmem>>, vector<8x8xf32>,
    %57 = vector.extract_strided_slice %32 {offsets = [0, 8], sizes = [8, 8], strides = [1, 1]} : vector<8x96xf32> to vector<8x8xf32>
    %cst_21 = arith.constant 0.353553385 : f32
    %58 = vector.broadcast %cst_21 : f32 to vector<8x8xf32>
    %59 = arith.mulf %57, %58 : vector<8x8xf32>
    %60 = arith.truncf %59 : vector<8x8xf32> to vector<8x8xbf16>
    %61 = vector.extract_strided_slice %32 {offsets = [0, 40], sizes = [8, 8], strides = [1, 1]} : vector<8x96xf32> to vector<8x8xf32>
    %62 = arith.truncf %61 : vector<8x8xf32> to vector<8x8xbf16>
    %63 = vector.extract_strided_slice %32 {offsets = [0, 72], sizes = [8, 8], strides = [1, 1]} : vector<8x96xf32> to vector<8x8xf32>
    %64 = arith.truncf %63 : vector<8x8xf32> to vector<8x8xbf16>
    "tpu.trace_start"() <{level = 10 : i32, message = "nd,md->nm"}> : () -> ()
    %cst_22 = arith.constant dense<0.000000e+00> : vector<8x8xf32>
    %65 = tpu.matmul %60, %62, %cst_22 {dimension_numbers = #tpu.dot_dimension_numbers<[1], [1], [0], [0], [0, 0, 1, 0], [], []>} : vector<8x8xbf16>, vector<8x8xbf16>, vector<8x8xf32> -> vector<8x8xf32>
    %cst_23 = arith.constant -1.000000e+30 : f32
    "tpu.trace_stop"() : () -> ()
    %66 = vector.broadcast %cst_23 : f32 to vector<8x8xf32>
    %67 = arith.select %6, %65, %66 : vector<8x8xi1>, vector<8x8xf32>
    %cst_24 = arith.constant dense<0xFF800000> : vector<8xf32>
    %68 = vector.multi_reduction <maximumf>, %67, %cst_24 [1] : vector<8x8xf32> to vector<8xf32>
    %69 = vector.shape_cast %68 : vector<8xf32> to vector<8x1xf32>
    %70 = vector.broadcast %69 : vector<8x1xf32> to vector<8x8xf32>
    %71 = arith.subf %67, %70 : vector<8x8xf32>
    %72 = math.exp %71 : vector<8x8xf32>
    %cst_25 = arith.constant dense<0.000000e+00> : vector<8xf32>
    %73 = vector.multi_reduction <add>, %72, %cst_25 [1] : vector<8x8xf32> to vector<8xf32>
    %74 = vector.shape_cast %73 : vector<8xf32> to vector<8x1xf32>
    %75 = tpu.reciprocal %74 {approx = true} : vector<8x1xf32> -> vector<8x1xf32>
    %76 = vector.broadcast %75 : vector<8x1xf32> to vector<8x8xf32>
    %77 = arith.mulf %72, %76 : vector<8x8xf32>
    %78 = arith.truncf %77 : vector<8x8xf32> to vector<8x8xbf16>
    %cst_26 = arith.constant dense<0.000000e+00> : vector<8x8xf32>
    %79 = tpu.matmul %78, %64, %cst_26 {dimension_numbers = #tpu.dot_dimension_numbers<[1], [0], [0], [1], [0, 0, 1, 1], [], []>} : vector<8x8xbf16>, vector<8x8xbf16>, vector<8x8xf32> -> vector<8x8xf32>
    %c0_27 = arith.constant 0 : index
    %c8 = arith.constant 8 : index
    %80 = vector.load %arg16[%c0_27, %c8] : memref<8x32xf32, #tpu.memory_space<vmem>>, vector<8x8xf32>
    tpu.vector_store %arg16[%c0_27, %c8], %79 {strides = array<i32>} : memref<8x32xf32, #tpu.memory_space<vmem>>, vector<8x8xf32>,
    %81 = vector.extract_strided_slice %32 {offsets = [0, 16], sizes = [8, 8], strides = [1, 1]} : vector<8x96xf32> to vector<8x8xf32>
    %cst_28 = arith.constant 0.353553385 : f32
    %82 = vector.broadcast %cst_28 : f32 to vector<8x8xf32>
    %83 = arith.mulf %81, %82 : vector<8x8xf32>
    %84 = arith.truncf %83 : vector<8x8xf32> to vector<8x8xbf16>
    %85 = vector.extract_strided_slice %32 {offsets = [0, 48], sizes = [8, 8], strides = [1, 1]} : vector<8x96xf32> to vector<8x8xf32>
    %86 = arith.truncf %85 : vector<8x8xf32> to vector<8x8xbf16>
    %87 = vector.extract_strided_slice %32 {offsets = [0, 80], sizes = [8, 8], strides = [1, 1]} : vector<8x96xf32> to vector<8x8xf32>
    %88 = arith.truncf %87 : vector<8x8xf32> to vector<8x8xbf16>
    "tpu.trace_start"() <{level = 10 : i32, message = "nd,md->nm"}> : () -> ()
    %cst_29 = arith.constant dense<0.000000e+00> : vector<8x8xf32>
    %89 = tpu.matmul %84, %86, %cst_29 {dimension_numbers = #tpu.dot_dimension_numbers<[1], [1], [0], [0], [0, 0, 1, 0], [], []>} : vector<8x8xbf16>, vector<8x8xbf16>, vector<8x8xf32> -> vector<8x8xf32>
    %cst_30 = arith.constant -1.000000e+30 : f32
    "tpu.trace_stop"() : () -> ()
    %90 = vector.broadcast %cst_30 : f32 to vector<8x8xf32>
    %91 = arith.select %6, %89, %90 : vector<8x8xi1>, vector<8x8xf32>
    %cst_31 = arith.constant dense<0xFF800000> : vector<8xf32>
    %92 = vector.multi_reduction <maximumf>, %91, %cst_31 [1] : vector<8x8xf32> to vector<8xf32>
    %93 = vector.shape_cast %92 : vector<8xf32> to vector<8x1xf32>
    %94 = vector.broadcast %93 : vector<8x1xf32> to vector<8x8xf32>
    %95 = arith.subf %91, %94 : vector<8x8xf32>
    %96 = math.exp %95 : vector<8x8xf32>
    %cst_32 = arith.constant dense<0.000000e+00> : vector<8xf32>
    %97 = vector.multi_reduction <add>, %96, %cst_32 [1] : vector<8x8xf32> to vector<8xf32>
    %98 = vector.shape_cast %97 : vector<8xf32> to vector<8x1xf32>
    %99 = tpu.reciprocal %98 {approx = true} : vector<8x1xf32> -> vector<8x1xf32>
    %100 = vector.broadcast %99 : vector<8x1xf32> to vector<8x8xf32>
    %101 = arith.mulf %96, %100 : vector<8x8xf32>
    %102 = arith.truncf %101 : vector<8x8xf32> to vector<8x8xbf16>
    %cst_33 = arith.constant dense<0.000000e+00> : vector<8x8xf32>
    %103 = tpu.matmul %102, %88, %cst_33 {dimension_numbers = #tpu.dot_dimension_numbers<[1], [0], [0], [1], [0, 0, 1, 1], [], []>} : vector<8x8xbf16>, vector<8x8xbf16>, vector<8x8xf32> -> vector<8x8xf32>
    %c0_34 = arith.constant 0 : index
    %c16 = arith.constant 16 : index
    %104 = vector.load %arg16[%c0_34, %c16] : memref<8x32xf32, #tpu.memory_space<vmem>>, vector<8x8xf32>
    tpu.vector_store %arg16[%c0_34, %c16], %103 {strides = array<i32>} : memref<8x32xf32, #tpu.memory_space<vmem>>, vector<8x8xf32>,
    %105 = vector.extract_strided_slice %32 {offsets = [0, 24], sizes = [8, 8], strides = [1, 1]} : vector<8x96xf32> to vector<8x8xf32>
    %cst_35 = arith.constant 0.353553385 : f32
    %106 = vector.broadcast %cst_35 : f32 to vector<8x8xf32>
    %107 = arith.mulf %105, %106 : vector<8x8xf32>
    %108 = arith.truncf %107 : vector<8x8xf32> to vector<8x8xbf16>
    %109 = vector.extract_strided_slice %32 {offsets = [0, 56], sizes = [8, 8], strides = [1, 1]} : vector<8x96xf32> to vector<8x8xf32>
    %110 = arith.truncf %109 : vector<8x8xf32> to vector<8x8xbf16>
    %111 = vector.extract_strided_slice %32 {offsets = [0, 88], sizes = [8, 8], strides = [1, 1]} : vector<8x96xf32> to vector<8x8xf32>
    %112 = arith.truncf %111 : vector<8x8xf32> to vector<8x8xbf16>
    "tpu.trace_start"() <{level = 10 : i32, message = "nd,md->nm"}> : () -> ()
    %cst_36 = arith.constant dense<0.000000e+00> : vector<8x8xf32>
    %113 = tpu.matmul %108, %110, %cst_36 {dimension_numbers = #tpu.dot_dimension_numbers<[1], [1], [0], [0], [0, 0, 1, 0], [], []>} : vector<8x8xbf16>, vector<8x8xbf16>, vector<8x8xf32> -> vector<8x8xf32>
    %cst_37 = arith.constant -1.000000e+30 : f32
    "tpu.trace_stop"() : () -> ()
    %114 = vector.broadcast %cst_37 : f32 to vector<8x8xf32>
    %115 = arith.select %6, %113, %114 : vector<8x8xi1>, vector<8x8xf32>
    %cst_38 = arith.constant dense<0xFF800000> : vector<8xf32>
    %116 = vector.multi_reduction <maximumf>, %115, %cst_38 [1] : vector<8x8xf32> to vector<8xf32>
    %117 = vector.shape_cast %116 : vector<8xf32> to vector<8x1xf32>
    %118 = vector.broadcast %117 : vector<8x1xf32> to vector<8x8xf32>
    %119 = arith.subf %115, %118 : vector<8x8xf32>
    %120 = math.exp %119 : vector<8x8xf32>
    %cst_39 = arith.constant dense<0.000000e+00> : vector<8xf32>
    %121 = vector.multi_reduction <add>, %120, %cst_39 [1] : vector<8x8xf32> to vector<8xf32>
    %122 = vector.shape_cast %121 : vector<8xf32> to vector<8x1xf32>
    %123 = tpu.reciprocal %122 {approx = true} : vector<8x1xf32> -> vector<8x1xf32>
    %124 = vector.broadcast %123 : vector<8x1xf32> to vector<8x8xf32>
    %125 = arith.mulf %120, %124 : vector<8x8xf32>
    %126 = arith.truncf %125 : vector<8x8xf32> to vector<8x8xbf16>
    %cst_40 = arith.constant dense<0.000000e+00> : vector<8x8xf32>
    %127 = tpu.matmul %126, %112, %cst_40 {dimension_numbers = #tpu.dot_dimension_numbers<[1], [0], [0], [1], [0, 0, 1, 1], [], []>} : vector<8x8xbf16>, vector<8x8xbf16>, vector<8x8xf32> -> vector<8x8xf32>
    %c0_41 = arith.constant 0 : index
    %c24 = arith.constant 24 : index
    %128 = vector.load %arg16[%c0_41, %c24] : memref<8x32xf32, #tpu.memory_space<vmem>>, vector<8x8xf32>
    tpu.vector_store %arg16[%c0_41, %c24], %127 {strides = array<i32>} : memref<8x32xf32, #tpu.memory_space<vmem>>, vector<8x8xf32>,
    %c0_42 = arith.constant 0 : index
    %c0_43 = arith.constant 0 : index
    %129 = vector.load %arg16[%c0_42, %c0_43] : memref<8x32xf32, #tpu.memory_space<vmem>>, vector<8x32xf32>
    %130 = arith.truncf %129 : vector<8x32xf32> to vector<8x32xbf16>
    %c0_44 = arith.constant 0 : index
    %c0_45 = arith.constant 0 : index
    %c0_46 = arith.constant 0 : index
    %131 = vector.load %arg8[%c0_44, %c0_45, %c0_46] : memref<1x32x32xbf16, #tpu.memory_space<vmem>>, vector<1x32x32xbf16>
    %132 = vector.shape_cast %131 : vector<1x32x32xbf16> to vector<32x32xbf16>
    %cst_47 = arith.constant dense<0.000000e+00> : vector<8x32xf32>
    %133 = tpu.matmul %130, %132, %cst_47 {dimension_numbers = #tpu.dot_dimension_numbers<[1], [0], [0], [1], [0, 0, 1, 1], [], []>} : vector<8x32xbf16>, vector<32x32xbf16>, vector<8x32xf32> -> vector<8x32xf32>
    %134 = arith.addf %3, %133 : vector<8x32xf32>
    %c0_48 = arith.constant 0 : index
    %c0_49 = arith.constant 0 : index
    %c0_50 = arith.constant 0 : index
    %135 = vector.load %arg9[%c0_48, %c0_49, %c0_50] : memref<1x1x32xf32, #tpu.memory_space<vmem>>, vector<1x1x32xf32>
    %136 = vector.shape_cast %135 : vector<1x1x32xf32> to vector<1x32xf32>
    %cst_51 = arith.constant dense<0.000000e+00> : vector<8xf32>
    %137 = vector.multi_reduction <add>, %134, %cst_51 [1] : vector<8x32xf32> to vector<8xf32>
    %138 = vector.shape_cast %137 : vector<8xf32> to vector<8x1xf32>
    %cst_52 = arith.constant 3.200000e+01 : f32
    %139 = vector.broadcast %cst_52 : f32 to vector<8x1xf32>
    %140 = arith.divf %138, %139 : vector<8x1xf32>
    %141 = vector.broadcast %140 : vector<8x1xf32> to vector<8x32xf32>
    %142 = arith.subf %134, %141 : vector<8x32xf32>
    %143 = arith.mulf %142, %142 : vector<8x32xf32>
    %cst_53 = arith.constant dense<0.000000e+00> : vector<8xf32>
    %144 = vector.multi_reduction <add>, %143, %cst_53 [1] : vector<8x32xf32> to vector<8xf32>
    %145 = vector.shape_cast %144 : vector<8xf32> to vector<8x1xf32>
    %cst_54 = arith.constant 3.200000e+01 : f32
    %146 = vector.broadcast %cst_54 : f32 to vector<8x1xf32>
    %147 = arith.divf %145, %146 : vector<8x1xf32>
    %148 = vector.broadcast %140 : vector<8x1xf32> to vector<8x32xf32>
    %149 = arith.subf %134, %148 : vector<8x32xf32>
    %cst_55 = arith.constant 9.99999974E-6 : f32
    %150 = vector.broadcast %cst_55 : f32 to vector<8x1xf32>
    %151 = arith.addf %147, %150 : vector<8x1xf32>
    %152 = math.rsqrt %151 : vector<8x1xf32>
    %153 = vector.broadcast %152 : vector<8x1xf32> to vector<8x32xf32>
    %154 = arith.mulf %149, %153 : vector<8x32xf32>
    %155 = vector.broadcast %136 : vector<1x32xf32> to vector<8x32xf32>
    %156 = arith.mulf %154, %155 : vector<8x32xf32>
    %157 = arith.truncf %156 : vector<8x32xf32> to vector<8x32xbf16>
    %c0_56 = arith.constant 0 : index
    %c0_57 = arith.constant 0 : index
    %c0_58 = arith.constant 0 : index
    %158 = vector.load %arg10[%c0_56, %c0_57, %c0_58] : memref<1x32x128xbf16, #tpu.memory_space<vmem>>, vector<1x32x128xbf16>
    %159 = vector.shape_cast %158 : vector<1x32x128xbf16> to vector<32x128xbf16>
    %cst_59 = arith.constant dense<0.000000e+00> : vector<8x128xf32>
    %160 = tpu.matmul %157, %159, %cst_59 {dimension_numbers = #tpu.dot_dimension_numbers<[1], [0], [0], [1], [0, 0, 1, 1], [], []>} : vector<8x32xbf16>, vector<32x128xbf16>, vector<8x128xf32> -> vector<8x128xf32>
    %cst_60 = arith.constant 5.000000e-01 : f32
    %161 = vector.broadcast %cst_60 : f32 to vector<8x128xf32>
    %162 = arith.mulf %161, %160 : vector<8x128xf32>
    %cst_61 = arith.constant 4.471500e-02 : f32
    %163 = vector.broadcast %cst_61 : f32 to vector<8x128xf32>
    %164 = arith.mulf %163, %160 : vector<8x128xf32>
    %165 = arith.mulf %164, %160 : vector<8x128xf32>
    %166 = arith.mulf %165, %160 : vector<8x128xf32>
    %167 = arith.addf %160, %166 : vector<8x128xf32>
    %cst_62 = arith.constant 0.797884583 : f32
    %168 = vector.broadcast %cst_62 : f32 to vector<8x128xf32>
    %169 = arith.mulf %168, %167 : vector<8x128xf32>
    %170 = math.tanh %169 : vector<8x128xf32>
    %cst_63 = arith.constant 1.000000e+00 : f32
    %171 = vector.broadcast %cst_63 : f32 to vector<8x128xf32>
    %172 = arith.addf %171, %170 : vector<8x128xf32>
    %173 = arith.mulf %162, %172 : vector<8x128xf32>
    %174 = arith.truncf %173 : vector<8x128xf32> to vector<8x128xbf16>
    %c0_64 = arith.constant 0 : index
    %c0_65 = arith.constant 0 : index
    %c0_66 = arith.constant 0 : index
    %175 = vector.load %arg11[%c0_64, %c0_65, %c0_66] : memref<1x128x32xbf16, #tpu.memory_space<vmem>>, vector<1x128x32xbf16>
    %176 = vector.shape_cast %175 : vector<1x128x32xbf16> to vector<128x32xbf16>
    %cst_67 = arith.constant dense<0.000000e+00> : vector<8x32xf32>
    %177 = tpu.matmul %174, %176, %cst_67 {dimension_numbers = #tpu.dot_dimension_numbers<[1], [0], [0], [1], [0, 0, 1, 1], [], []>} : vector<8x128xbf16>, vector<128x32xbf16>, vector<8x32xf32> -> vector<8x32xf32>
    %178 = arith.addf %134, %177 : vector<8x32xf32>
    %c0_68 = arith.constant 0 : index
    %c0_69 = arith.constant 0 : index
    %179 = vector.load %arg15[%c0_68, %c0_69] : memref<8x32xf32, #tpu.memory_space<vmem>>, vector<8x32xf32>
    tpu.vector_store %arg15[%c0_68, %c0_69], %178 {strides = array<i32>} : memref<8x32xf32, #tpu.memory_space<vmem>>, vector<8x32xf32>,
    %c1_i32 = arith.constant 1 : i32
    %180 = arith.cmpi eq, %arg1, %c1_i32 : i32
    %181 = arith.extui %180 : i1 to i32
    %c0_i32_70 = arith.constant 0 : i32
    %182 = arith.cmpi ne, %181, %c0_i32_70 : i32
    scf.if %182 {
      %c0_71 = arith.constant 0 : index
      %c0_72 = arith.constant 0 : index
      %183 = vector.load %arg12[%c0_71, %c0_72] : memref<1x32xf32, #tpu.memory_space<vmem>>, vector<1x32xf32>
      %cst_73 = arith.constant dense<0.000000e+00> : vector<8xf32>
      %184 = vector.multi_reduction <add>, %178, %cst_73 [1] : vector<8x32xf32> to vector<8xf32>
      %185 = vector.shape_cast %184 : vector<8xf32> to vector<8x1xf32>
      %cst_74 = arith.constant 3.200000e+01 : f32
      %186 = vector.broadcast %cst_74 : f32 to vector<8x1xf32>
      %187 = arith.divf %185, %186 : vector<8x1xf32>
      %188 = vector.broadcast %187 : vector<8x1xf32> to vector<8x32xf32>
      %189 = arith.subf %178, %188 : vector<8x32xf32>
      %190 = arith.mulf %189, %189 : vector<8x32xf32>
      %cst_75 = arith.constant dense<0.000000e+00> : vector<8xf32>
      %191 = vector.multi_reduction <add>, %190, %cst_75 [1] : vector<8x32xf32> to vector<8xf32>
      %192 = vector.shape_cast %191 : vector<8xf32> to vector<8x1xf32>
      %cst_76 = arith.constant 3.200000e+01 : f32
      %193 = vector.broadcast %cst_76 : f32 to vector<8x1xf32>
      %194 = arith.divf %192, %193 : vector<8x1xf32>
      %195 = vector.broadcast %187 : vector<8x1xf32> to vector<8x32xf32>
      %196 = arith.subf %178, %195 : vector<8x32xf32>
      %cst_77 = arith.constant 9.99999974E-6 : f32
      %197 = vector.broadcast %cst_77 : f32 to vector<8x1xf32>
      %198 = arith.addf %194, %197 : vector<8x1xf32>
      %199 = math.rsqrt %198 : vector<8x1xf32>
      %200 = vector.broadcast %199 : vector<8x1xf32> to vector<8x32xf32>
      %201 = arith.mulf %196, %200 : vector<8x32xf32>
      %202 = vector.broadcast %183 : vector<1x32xf32> to vector<8x32xf32>
      %203 = arith.mulf %201, %202 : vector<8x32xf32>
      %204 = arith.truncf %203 : vector<8x32xf32> to vector<8x32xbf16>
      %c0_78 = arith.constant 0 : index
      %c0_79 = arith.constant 0 : index
      %205 = vector.load %arg13[%c0_78, %c0_79] : memref<32x4xbf16, #tpu.memory_space<vmem>>, vector<32x4xbf16>
      %cst_80 = arith.constant dense<0.000000e+00> : vector<8x4xf32>
      %206 = tpu.matmul %204, %205, %cst_80 {dimension_numbers = #tpu.dot_dimension_numbers<[1], [0], [0], [1], [0, 0, 1, 1], [], []>} : vector<8x32xbf16>, vector<32x4xbf16>, vector<8x4xf32> -> vector<8x4xf32>
      %c0_81 = arith.constant 0 : index
      %c0_82 = arith.constant 0 : index
      %207 = vector.load %arg3[%c0_81, %c0_82] : memref<8x4xf32, #tpu.memory_space<vmem>>, vector<8x4xf32>
      %208 = arith.subf %206, %207 : vector<8x4xf32>
      %209 = arith.mulf %208, %208 : vector<8x4xf32>
      %210 = vector.shape_cast %209 : vector<8x4xf32> to vector<1x8x4xf32>
      %cst_83 = arith.constant dense<0.000000e+00> : vector<1xf32>
      %211 = vector.multi_reduction <add>, %210, %cst_83 [1, 2] : vector<1x8x4xf32> to vector<1xf32>
      %212 = vector.shape_cast %211 : vector<1xf32> to vector<1x1x1xf32>
      %213 = vector.extract %212[0, 0, 0] : f32 from vector<1x1x1xf32>
      %214 = vector.broadcast %213 : f32 to vector<1x1xf32>
      %c0_84 = arith.constant 0 : index
      %c0_85 = arith.constant 0 : index
      %c0_86 = arith.constant 0 : index
      %215 = vector.load %arg14[%c0_84, %c0_85, %c0_86] : memref<1x1x1xf32, #tpu.memory_space<vmem>>, vector<1x1x1xf32>
      %216 = vector.shape_cast %215 : vector<1x1x1xf32> to vector<1x1xf32>
      %217 = vector.shape_cast %214 : vector<1x1xf32> to vector<1x1x1xf32>
      tpu.vector_store %arg14[%c0_84, %c0_85, %c0_86], %217 {strides = array<i32>} : memref<1x1x1xf32, #tpu.memory_space<vmem>>, vector<1x1x1xf32>,
    } else {
    }
    return
  }
  func.func @transform_0(%arg0: i32, %arg1: i32) -> (i32, i32) {
    %c0_i32 = arith.constant 0 : i32
    %c0_i32_0 = arith.constant 0 : i32
    return %arg0, %c0_i32 : i32, i32
  }
  func.func @transform_1(%arg0: i32, %arg1: i32) -> (i32, i32) {
    %c0_i32 = arith.constant 0 : i32
    %c0_i32_0 = arith.constant 0 : i32
    return %arg0, %c0_i32 : i32, i32
  }
  func.func @transform_2(%arg0: i32, %arg1: i32) -> (i32, i32) {
    %c0_i32 = arith.constant 0 : i32
    %c0_i32_0 = arith.constant 0 : i32
    %c0_i32_1 = arith.constant 0 : i32
    return %c0_i32, %c0_i32_0 : i32, i32
  }
  func.func @transform_3(%arg0: i32, %arg1: i32) -> (i32, i32) {
    %c0_i32 = arith.constant 0 : i32
    %c0_i32_0 = arith.constant 0 : i32
    %c0_i32_1 = arith.constant 0 : i32
    return %c0_i32, %c0_i32_0 : i32, i32
  }
  func.func @transform_4(%arg0: i32, %arg1: i32) -> (i32, i32, i32) {
    %c0_i32 = arith.constant 0 : i32
    %c0_i32_0 = arith.constant 0 : i32
    %c0_i32_1 = arith.constant 0 : i32
    return %arg1, %c0_i32, %c0_i32_0 : i32, i32, i32
  }
  func.func @transform_5(%arg0: i32, %arg1: i32) -> (i32, i32, i32) {
    %c0_i32 = arith.constant 0 : i32
    %c0_i32_0 = arith.constant 0 : i32
    %c0_i32_1 = arith.constant 0 : i32
    return %arg1, %c0_i32, %c0_i32_0 : i32, i32, i32
  }
  func.func @transform_6(%arg0: i32, %arg1: i32) -> (i32, i32, i32) {
    %c0_i32 = arith.constant 0 : i32
    %c0_i32_0 = arith.constant 0 : i32
    %c0_i32_1 = arith.constant 0 : i32
    return %arg1, %c0_i32, %c0_i32_0 : i32, i32, i32
  }
  func.func @transform_7(%arg0: i32, %arg1: i32) -> (i32, i32, i32) {
    %c0_i32 = arith.constant 0 : i32
    %c0_i32_0 = arith.constant 0 : i32
    %c0_i32_1 = arith.constant 0 : i32
    return %arg1, %c0_i32, %c0_i32_0 : i32, i32, i32
  }
  func.func @transform_8(%arg0: i32, %arg1: i32) -> (i32, i32, i32) {
    %c0_i32 = arith.constant 0 : i32
    %c0_i32_0 = arith.constant 0 : i32
    %c0_i32_1 = arith.constant 0 : i32
    return %arg1, %c0_i32, %c0_i32_0 : i32, i32, i32
  }
  func.func @transform_9(%arg0: i32, %arg1: i32) -> (i32, i32, i32) {
    %c0_i32 = arith.constant 0 : i32
    %c0_i32_0 = arith.constant 0 : i32
    %c0_i32_1 = arith.constant 0 : i32
    return %arg1, %c0_i32, %c0_i32_0 : i32, i32, i32
  }
  func.func @transform_10(%arg0: i32, %arg1: i32) -> (i32, i32) {
    %c0_i32 = arith.constant 0 : i32
    %c0_i32_0 = arith.constant 0 : i32
    %c0_i32_1 = arith.constant 0 : i32
    return %c0_i32, %c0_i32_0 : i32, i32
  }
  func.func @transform_11(%arg0: i32, %arg1: i32) -> (i32, i32) {
    %c0_i32 = arith.constant 0 : i32
    %c0_i32_0 = arith.constant 0 : i32
    %c0_i32_1 = arith.constant 0 : i32
    return %c0_i32, %c0_i32_0 : i32, i32
  }
  func.func @transform_12(%arg0: i32, %arg1: i32) -> (i32, i32, i32) {
    %c0_i32 = arith.constant 0 : i32
    %c0_i32_0 = arith.constant 0 : i32
    %c0_i32_1 = arith.constant 0 : i32
    return %arg0, %c0_i32, %c0_i32_0 : i32, i32, i32
  }
}

</mosaic_0001>

<llo_original>
// kernel: tpu_custom_call.1
$region0: #{tpu_custom_call.1}
  #allocation0 [shape = 'u32[]', space=smem, size = 0x4, offset = 0x4, fixed_abs, tag = 'smem constant byte address 0x4 - core index']
  #allocation1 [shape = 'u32[144,128]{1,0:T(1,128)}', space=vmem, size = 0x12000, scoped, tag = 'internal scratch']
  #allocation2 [shape = 'f32[8,32]{1,0:T(8,128)}', space=vmem, size = 0x1000, scoped, tag = 'scratch operand']
  #allocation3 [shape = 'f32[8,32]{1,0:T(8,128)}', space=vmem, size = 0x1000, scoped, tag = 'scratch operand']
  %s0 = inlined_call_operand.vmem [shape: bf16[16,4], index: 0, kind: input, shape index: {}]
  %s1 = inlined_call_operand.vmem [shape: f32[16,4], index: 1, kind: input, shape index: {}]
  %s2 = inlined_call_operand.vmem [shape: f32[8,32], index: 2, kind: input, shape index: {}]
  %s3 = inlined_call_operand.vmem [shape: bf16[4,32], index: 3, kind: input, shape index: {}]
  %s4 = inlined_call_operand.vmem [shape: f32[2,1,32], index: 4, kind: input, shape index: {}]
  %s5 = inlined_call_operand.vmem [shape: bf16[2,32,96], index: 5, kind: input, shape index: {}]
  %s6 = inlined_call_operand.vmem [shape: bf16[2,32,32], index: 6, kind: input, shape index: {}]
  %s7 = inlined_call_operand.vmem [shape: f32[2,1,32], index: 7, kind: input, shape index: {}]
  %s8 = inlined_call_operand.vmem [shape: bf16[2,32,128], index: 8, kind: input, shape index: {}]
  %s9 = inlined_call_operand.vmem [shape: bf16[2,128,32], index: 9, kind: input, shape index: {}]
  %s10 = inlined_call_operand.vmem [shape: f32[1,32], index: 10, kind: input, shape index: {}]
  %s11 = inlined_call_operand.vmem [shape: bf16[32,4], index: 11, kind: input, shape index: {}]
  %s12 = inlined_call_operand.vmem [shape: f32[2,1,1], index: 12, kind: output, shape index: {}]
  %s13 = sld [smem:[#allocation0]]
  $region89: #{tpu_custom_call.1} parent=0
    _
  %s15 = ssub.s32 1, %s13
  %s16 = scalar_select 0, %s15, %s13
  loop: start=0, step=1, limit=6
  $region2: #{tpu_custom_call.1} parent=0 // loop_pre_header
    _
  $region3: #{tpu_custom_call.1} parent=0 // loop_header
    %s18 = sphi 0, %s22
    %p19 = scmp.ge.s32.totalorder %s18, 6
    %s25 = sphi 0, %s37
    %s26 = sphi 0, %s33
    %s27 = sphi 0, %s25
    %s28 = sphi 0, %s26
    %s29 = sphi 0, %s27
    %s30 = sphi 0, %s28
    %s40 = sphi 0, %s42
    %s43 = sphi 0, %s40
    %s44 = sphi 0, %s43
    %s60 = sphi 0, %s44
    %s66 = sphi 0, %s68
    %s69 = sphi 0, %s66
    %s70 = sphi 0, %s69
    %s86 = sphi 0, %s70
    %s90 = sphi 0, %s90
    %s92 = sphi 0, %s90
    %s93 = sphi 0, %s92
    %s107 = sphi 0, %s93
    %s111 = sphi 0, %s111
    %s113 = sphi 0, %s111
    %s114 = sphi 0, %s113
    %s128 = sphi 0, %s114
    %s134 = sphi 0, %s136
    %s137 = sphi 0, %s134
    %s138 = sphi 0, %s137
    %s154 = sphi 0, %s138
    %s160 = sphi 0, %s162
    %s163 = sphi 0, %s160
    %s164 = sphi 0, %s163
    %s180 = sphi 0, %s164
    %s186 = sphi 0, %s188
    %s189 = sphi 0, %s186
    %s190 = sphi 0, %s189
    %s206 = sphi 0, %s190
    %s212 = sphi 0, %s214
    %s215 = sphi 0, %s212
    %s216 = sphi 0, %s215
    %s232 = sphi 0, %s216
    %s238 = sphi 0, %s240
    %s241 = sphi 0, %s238
    %s242 = sphi 0, %s241
    %s258 = sphi 0, %s242
    %s264 = sphi 0, %s266
    %s267 = sphi 0, %s264
    %s268 = sphi 0, %s267
    %s284 = sphi 0, %s268
    %s288 = sphi 0, %s288
    %s290 = sphi 0, %s288
    %s291 = sphi 0, %s290
    %s305 = sphi 0, %s291
    %s309 = sphi 0, %s309
    %s311 = sphi 0, %s309
    %s312 = sphi 0, %s311
    %s326 = sphi 0, %s312
    %s332 = sphi 0, %s334
    %s335 = sphi 0, %s332
    %s336 = sphi 0, %s335
    %s352 = sphi 0, %s336
  $region4: #{tpu_custom_call.1} parent=0 // loop_header_branch
    %21 = sbr.rel (%p19) target = $region8
  $region5: #{tpu_custom_call.1} parent=0 // loop_body
    %s23 = ssub.s32 %s18, 1
    %s24 = ssub.s32 %s18, 2
    %s31 = sadd.s32 1, %s26
    %p32 = scmp.ge.s32.totalorder %s31, 2
    %s33 = scalar_select %p32, 0, %s31
    %s34 = sadd.s32 1, %s25
    %s35 = scalar_select %p32, %s34, %s25
    %p36 = scmp.ge.s32.totalorder %s35, 2
    %s37 = scalar_select %p36, 0, %s35
    %s38 = ssub.s32 %s25, %s37
    %p39 = scmp.eq.s32.totalorder %s38, 0
    %s41 = sadd.s32 %s40, 1
    %s42 = scalar_select %p39, %s40, %s41
    %p45 = pneg %p39
    %p46 = scmp.eq.s32.totalorder %s18, 3
    %p47 = por %p45, %p46
    %p48 = scmp.ne.s32.totalorder %s40, %s43
    %p49 = scmp.eq.s32.totalorder %s18, 0
    %p50 = por %p48, %p49
    %p51 = scmp.ne.s32.totalorder %s40, %s43
    %p52 = scmp.eq.s32.totalorder %s23, 3
    %p53 = por %p51, %p52
    %p54 = scmp.ne.s32.totalorder %s43, %s44
    %p55 = scmp.eq.s32.totalorder %s23, 0
    %p56 = por %p54, %p55
    %p57 = scmp.ne.s32.totalorder %s43, %s44
    %p58 = scmp.eq.s32.totalorder %s24, 3
    %p59 = por %p57, %p58
    %p61 = scmp.ne.s32.totalorder %s44, %s60
    %p62 = scmp.eq.s32.totalorder %s24, 0
    %p63 = por %p61, %p62
    %s64 = ssub.s32 %s25, %s37
    %p65 = scmp.eq.s32.totalorder %s64, 0
    %s67 = sadd.s32 %s66, 1
    %s68 = scalar_select %p65, %s66, %s67
    %p71 = pneg %p65
    %p72 = scmp.eq.s32.totalorder %s18, 3
    %p73 = por %p71, %p72
    %p74 = scmp.ne.s32.totalorder %s66, %s69
    %p75 = scmp.eq.s32.totalorder %s18, 0
    %p76 = por %p74, %p75
    %p77 = scmp.ne.s32.totalorder %s66, %s69
    %p78 = scmp.eq.s32.totalorder %s23, 3
    %p79 = por %p77, %p78
    %p80 = scmp.ne.s32.totalorder %s69, %s70
    %p81 = scmp.eq.s32.totalorder %s23, 0
    %p82 = por %p80, %p81
    %p83 = scmp.ne.s32.totalorder %s69, %s70
    %p84 = scmp.eq.s32.totalorder %s24, 3
    %p85 = por %p83, %p84
    %p87 = scmp.ne.s32.totalorder %s70, %s86
    %p88 = scmp.eq.s32.totalorder %s24, 0
    %p89 = por %p87, %p88
    %s91 = sadd.s32 %s90, 1
    %p94 = scmp.eq.s32.totalorder %s18, 3
    %p95 = scmp.ne.s32.totalorder %s90, %s92
    %p96 = scmp.eq.s32.totalorder %s18, 0
    %p97 = por %p95, %p96
    %p98 = scmp.ne.s32.totalorder %s90, %s92
    %p99 = scmp.eq.s32.totalorder %s23, 3
    %p100 = por %p98, %p99
    %p101 = scmp.ne.s32.totalorder %s92, %s93
    %p102 = scmp.eq.s32.totalorder %s23, 0
    %p103 = por %p101, %p102
    %p104 = scmp.ne.s32.totalorder %s92, %s93
    %p105 = scmp.eq.s32.totalorder %s24, 3
    %p106 = por %p104, %p105
    %p108 = scmp.ne.s32.totalorder %s93, %s107
    %p109 = scmp.eq.s32.totalorder %s24, 0
    %p110 = por %p108, %p109
    %s112 = sadd.s32 %s111, 1
    %p115 = scmp.eq.s32.totalorder %s18, 3
    %p116 = scmp.ne.s32.totalorder %s111, %s113
    %p117 = scmp.eq.s32.totalorder %s18, 0
    %p118 = por %p116, %p117
    %p119 = scmp.ne.s32.totalorder %s111, %s113
    %p120 = scmp.eq.s32.totalorder %s23, 3
    %p121 = por %p119, %p120
    %p122 = scmp.ne.s32.totalorder %s113, %s114
    %p123 = scmp.eq.s32.totalorder %s23, 0
    %p124 = por %p122, %p123
    %p125 = scmp.ne.s32.totalorder %s113, %s114
    %p126 = scmp.eq.s32.totalorder %s24, 3
    %p127 = por %p125, %p126
    %p129 = scmp.ne.s32.totalorder %s114, %s128
    %p130 = scmp.eq.s32.totalorder %s24, 0
    %p131 = por %p129, %p130
    %s132 = ssub.s32 %s26, %s33
    %p133 = scmp.eq.s32.totalorder %s132, 0
    %s135 = sadd.s32 %s134, 1
    %s136 = scalar_select %p133, %s134, %s135
    %p139 = pneg %p133
    %p140 = scmp.eq.s32.totalorder %s18, 3
    %p141 = por %p139, %p140
    %p142 = scmp.ne.s32.totalorder %s134, %s137
    %p143 = scmp.eq.s32.totalorder %s18, 0
    %p144 = por %p142, %p143
    %p145 = scmp.ne.s32.totalorder %s134, %s137
    %p146 = scmp.eq.s32.totalorder %s23, 3
    %p147 = por %p145, %p146
    %p148 = scmp.ne.s32.totalorder %s137, %s138
    %p149 = scmp.eq.s32.totalorder %s23, 0
    %p150 = por %p148, %p149
    %p151 = scmp.ne.s32.totalorder %s137, %s138
    %p152 = scmp.eq.s32.totalorder %s24, 3
    %p153 = por %p151, %p152
    %p155 = scmp.ne.s32.totalorder %s138, %s154
    %p156 = scmp.eq.s32.totalorder %s24, 0
    %p157 = por %p155, %p156
    %s158 = ssub.s32 %s26, %s33
    %p159 = scmp.eq.s32.totalorder %s158, 0
    %s161 = sadd.s32 %s160, 1
    %s162 = scalar_select %p159, %s160, %s161
    %p165 = pneg %p159
    %p166 = scmp.eq.s32.totalorder %s18, 3
    %p167 = por %p165, %p166
    %p168 = scmp.ne.s32.totalorder %s160, %s163
    %p169 = scmp.eq.s32.totalorder %s18, 0
    %p170 = por %p168, %p169
    %p171 = scmp.ne.s32.totalorder %s160, %s163
    %p172 = scmp.eq.s32.totalorder %s23, 3
    %p173 = por %p171, %p172
    %p174 = scmp.ne.s32.totalorder %s163, %s164
    %p175 = scmp.eq.s32.totalorder %s23, 0
    %p176 = por %p174, %p175
    %p177 = scmp.ne.s32.totalorder %s163, %s164
    %p178 = scmp.eq.s32.totalorder %s24, 3
    %p179 = por %p177, %p178
    %p181 = scmp.ne.s32.totalorder %s164, %s180
    %p182 = scmp.eq.s32.totalorder %s24, 0
    %p183 = por %p181, %p182
    %s184 = ssub.s32 %s26, %s33
    %p185 = scmp.eq.s32.totalorder %s184, 0
    %s187 = sadd.s32 %s186, 1
    %s188 = scalar_select %p185, %s186, %s187
    %p191 = pneg %p185
    %p192 = scmp.eq.s32.totalorder %s18, 3
    %p193 = por %p191, %p192
    %p194 = scmp.ne.s32.totalorder %s186, %s189
    %p195 = scmp.eq.s32.totalorder %s18, 0
    %p196 = por %p194, %p195
    %p197 = scmp.ne.s32.totalorder %s186, %s189
    %p198 = scmp.eq.s32.totalorder %s23, 3
    %p199 = por %p197, %p198
    %p200 = scmp.ne.s32.totalorder %s189, %s190
    %p201 = scmp.eq.s32.totalorder %s23, 0
    %p202 = por %p200, %p201
    %p203 = scmp.ne.s32.totalorder %s189, %s190
    %p204 = scmp.eq.s32.totalorder %s24, 3
    %p205 = por %p203, %p204
    %p207 = scmp.ne.s32.totalorder %s190, %s206
    %p208 = scmp.eq.s32.totalorder %s24, 0
    %p209 = por %p207, %p208
    %s210 = ssub.s32 %s26, %s33
    %p211 = scmp.eq.s32.totalorder %s210, 0
    %s213 = sadd.s32 %s212, 1
    %s214 = scalar_select %p211, %s212, %s213
    %p217 = pneg %p211
    %p218 = scmp.eq.s32.totalorder %s18, 3
    %p219 = por %p217, %p218
    %p220 = scmp.ne.s32.totalorder %s212, %s215
    %p221 = scmp.eq.s32.totalorder %s18, 0
    %p222 = por %p220, %p221
    %p223 = scmp.ne.s32.totalorder %s212, %s215
    %p224 = scmp.eq.s32.totalorder %s23, 3
    %p225 = por %p223, %p224
    %p226 = scmp.ne.s32.totalorder %s215, %s216
    %p227 = scmp.eq.s32.totalorder %s23, 0
    %p228 = por %p226, %p227
    %p229 = scmp.ne.s32.totalorder %s215, %s216
    %p230 = scmp.eq.s32.totalorder %s24, 3
    %p231 = por %p229, %p230
    %p233 = scmp.ne.s32.totalorder %s216, %s232
    %p234 = scmp.eq.s32.totalorder %s24, 0
    %p235 = por %p233, %p234
    %s236 = ssub.s32 %s26, %s33
    %p237 = scmp.eq.s32.totalorder %s236, 0
    %s239 = sadd.s32 %s238, 1
    %s240 = scalar_select %p237, %s238, %s239
    %p243 = pneg %p237
    %p244 = scmp.eq.s32.totalorder %s18, 3
    %p245 = por %p243, %p244
    %p246 = scmp.ne.s32.totalorder %s238, %s241
    %p247 = scmp.eq.s32.totalorder %s18, 0
    %p248 = por %p246, %p247
    %p249 = scmp.ne.s32.totalorder %s238, %s241
    %p250 = scmp.eq.s32.totalorder %s23, 3
    %p251 = por %p249, %p250
    %p252 = scmp.ne.s32.totalorder %s241, %s242
    %p253 = scmp.eq.s32.totalorder %s23, 0
    %p254 = por %p252, %p253
    %p255 = scmp.ne.s32.totalorder %s241, %s242
    %p256 = scmp.eq.s32.totalorder %s24, 3
    %p257 = por %p255, %p256
    %p259 = scmp.ne.s32.totalorder %s242, %s258
    %p260 = scmp.eq.s32.totalorder %s24, 0
    %p261 = por %p259, %p260
    %s262 = ssub.s32 %s26, %s33
    %p263 = scmp.eq.s32.totalorder %s262, 0
    %s265 = sadd.s32 %s264, 1
    %s266 = scalar_select %p263, %s264, %s265
    %p269 = pneg %p263
    %p270 = scmp.eq.s32.totalorder %s18, 3
    %p271 = por %p269, %p270
    %p272 = scmp.ne.s32.totalorder %s264, %s267
    %p273 = scmp.eq.s32.totalorder %s18, 0
    %p274 = por %p272, %p273
    %p275 = scmp.ne.s32.totalorder %s264, %s267
    %p276 = scmp.eq.s32.totalorder %s23, 3
    %p277 = por %p275, %p276
    %p278 = scmp.ne.s32.totalorder %s267, %s268
    %p279 = scmp.eq.s32.totalorder %s23, 0
    %p280 = por %p278, %p279
    %p281 = scmp.ne.s32.totalorder %s267, %s268
    %p282 = scmp.eq.s32.totalorder %s24, 3
    %p283 = por %p281, %p282
    %p285 = scmp.ne.s32.totalorder %s268, %s284
    %p286 = scmp.eq.s32.totalorder %s24, 0
    %p287 = por %p285, %p286
    %s289 = sadd.s32 %s288, 1
    %p292 = scmp.eq.s32.totalorder %s18, 3
    %p293 = scmp.ne.s32.totalorder %s288, %s290
    %p294 = scmp.eq.s32.totalorder %s18, 0
    %p295 = por %p293, %p294
    %p296 = scmp.ne.s32.totalorder %s288, %s290
    %p297 = scmp.eq.s32.totalorder %s23, 3
    %p298 = por %p296, %p297
    %p299 = scmp.ne.s32.totalorder %s290, %s291
    %p300 = scmp.eq.s32.totalorder %s23, 0
    %p301 = por %p299, %p300
    %p302 = scmp.ne.s32.totalorder %s290, %s291
    %p303 = scmp.eq.s32.totalorder %s24, 3
    %p304 = por %p302, %p303
    %p306 = scmp.ne.s32.totalorder %s291, %s305
    %p307 = scmp.eq.s32.totalorder %s24, 0
    %p308 = por %p306, %p307
    %s310 = sadd.s32 %s309, 1
    %p313 = scmp.eq.s32.totalorder %s18, 3
    %p314 = scmp.ne.s32.totalorder %s309, %s311
    %p315 = scmp.eq.s32.totalorder %s18, 0
    %p316 = por %p314, %p315
    %p317 = scmp.ne.s32.totalorder %s309, %s311
    %p318 = scmp.eq.s32.totalorder %s23, 3
    %p319 = por %p317, %p318
    %p320 = scmp.ne.s32.totalorder %s311, %s312
    %p321 = scmp.eq.s32.totalorder %s23, 0
    %p322 = por %p320, %p321
    %p323 = scmp.ne.s32.totalorder %s311, %s312
    %p324 = scmp.eq.s32.totalorder %s24, 3
    %p325 = por %p323, %p324
    %p327 = scmp.ne.s32.totalorder %s312, %s326
    %p328 = scmp.eq.s32.totalorder %s24, 0
    %p329 = por %p327, %p328
    %s330 = ssub.s32 %s25, %s37
    %p331 = scmp.eq.s32.totalorder %s330, 0
    %s333 = sadd.s32 %s332, 1
    %s334 = scalar_select %p331, %s332, %s333
    %p337 = pneg %p331
    %p338 = scmp.eq.s32.totalorder %s18, 3
    %p339 = por %p337, %p338
    %p340 = scmp.ne.s32.totalorder %s332, %s335
    %p341 = scmp.eq.s32.totalorder %s18, 0
    %p342 = por %p340, %p341
    %p343 = scmp.ne.s32.totalorder %s332, %s335
    %p344 = scmp.eq.s32.totalorder %s23, 3
    %p345 = por %p343, %p344
    %p346 = scmp.ne.s32.totalorder %s335, %s336
    %p347 = scmp.eq.s32.totalorder %s23, 0
    %p348 = por %p346, %p347
    %p349 = scmp.ne.s32.totalorder %s335, %s336
    %p350 = scmp.eq.s32.totalorder %s24, 3
    %p351 = por %p349, %p350
    %p353 = scmp.ne.s32.totalorder %s336, %s352
    %p354 = scmp.eq.s32.totalorder %s24, 0
    %p355 = por %p353, %p354
    %p356 = scmp.le.s32.totalorder 1, %s18
    %p357 = scmp.lt.s32.totalorder %s18, 5
    %p358 = pnand %p356, %p357
    %p359 = pneg %p358
    // Predicated region
    $region9: #{tpu_custom_call.1} parent=5 // pred_check
      _
    $region10: #{tpu_custom_call.1} parent=5 // pred_check_branch
      %361 = sbr.rel (%p358) target = $region12
    $region11: #{tpu_custom_call.1} parent=5 // pred_region
      %s362 = ssub.s32 %s18, 1
      // Predicated region
      $region13: #{tpu_custom_call.1} parent=11 // pred_check
        %p363 = pneg %p103
      $region14: #{tpu_custom_call.1} parent=11 // pred_check_branch
        %365 = sbr.rel (%p363) target = $region16
      $region15: #{tpu_custom_call.1} parent=11 // pred_region
        _
      $region16: #{tpu_custom_call.1} parent=11 // pred_fallthru
        _
      // Predicated region
      $region17: #{tpu_custom_call.1} parent=11 // pred_check
        %p366 = pneg %p124
      $region18: #{tpu_custom_call.1} parent=11 // pred_check_branch
        %368 = sbr.rel (%p366) target = $region20
      $region19: #{tpu_custom_call.1} parent=11 // pred_region
        _
      $region20: #{tpu_custom_call.1} parent=11 // pred_fallthru
        _
      // Predicated region
      $region21: #{tpu_custom_call.1} parent=11 // pred_check
        %p369 = pneg %p301
      $region22: #{tpu_custom_call.1} parent=11 // pred_check_branch
        %371 = sbr.rel (%p369) target = $region24
      $region23: #{tpu_custom_call.1} parent=11 // pred_region
        _
      $region24: #{tpu_custom_call.1} parent=11 // pred_fallthru
        _
      // Predicated region
      $region25: #{tpu_custom_call.1} parent=11 // pred_check
        %p372 = pneg %p322
      $region26: #{tpu_custom_call.1} parent=11 // pred_check_branch
        %374 = sbr.rel (%p372) target = $region28
      $region27: #{tpu_custom_call.1} parent=11 // pred_region
        _
      $region28: #{tpu_custom_call.1} parent=11 // pred_fallthru
        _
    $region12: #{tpu_custom_call.1} parent=5 // pred_fallthru
      _
    %p375 = scmp.lt.s32.totalorder %s18, 4
    // Predicated region
    $region29: #{tpu_custom_call.1} parent=5 // pred_check
      %p376 = pneg %p375
    $region30: #{tpu_custom_call.1} parent=5 // pred_check_branch
      %378 = sbr.rel (%p376) target = $region32
    $region31: #{tpu_custom_call.1} parent=5 // pred_region
      // Predicated region
      $region33: #{tpu_custom_call.1} parent=31 // pred_check
        %p379 = pneg %p50
      $region34: #{tpu_custom_call.1} parent=31 // pred_check_branch
        %381 = sbr.rel (%p379) target = $region36
      $region35: #{tpu_custom_call.1} parent=31 // pred_region
        %p382 = scmp.lt.s32.totalorder %s25, 1
        %s383 = scalar_select %p382, %s25, 1
        %s384 = smul.addr %s383, 4
        %s385 = scalar_lea.vmem %s0, %s384
      $region36: #{tpu_custom_call.1} parent=31 // pred_fallthru
        _
      // Predicated region
      $region37: #{tpu_custom_call.1} parent=31 // pred_check
        %p386 = pneg %p76
      $region38: #{tpu_custom_call.1} parent=31 // pred_check_branch
        %388 = sbr.rel (%p386) target = $region40
      $region39: #{tpu_custom_call.1} parent=31 // pred_region
        %p389 = scmp.lt.s32.totalorder %s25, 1
        %s390 = scalar_select %p389, %s25, 1
        %s391 = smul.addr %s390, 8
        %s392 = scalar_lea.vmem %s1, %s391
      $region40: #{tpu_custom_call.1} parent=31 // pred_fallthru
        _
      // Predicated region
      $region41: #{tpu_custom_call.1} parent=31 // pred_check
        %p393 = pneg %p144
      $region42: #{tpu_custom_call.1} parent=31 // pred_check_branch
        %395 = sbr.rel (%p393) target = $region44
      $region43: #{tpu_custom_call.1} parent=31 // pred_region
        %p396 = scmp.lt.s32.totalorder %s26, 1
        %s397 = scalar_select %p396, %s26, 1
        %s398 = scalar_lea.vmem %s4, %s397
      $region44: #{tpu_custom_call.1} parent=31 // pred_fallthru
        _
      // Predicated region
      $region45: #{tpu_custom_call.1} parent=31 // pred_check
        %p399 = pneg %p170
      $region46: #{tpu_custom_call.1} parent=31 // pred_check_branch
        %401 = sbr.rel (%p399) target = $region48
      $region47: #{tpu_custom_call.1} parent=31 // pred_region
        %p402 = scmp.lt.s32.totalorder %s26, 1
        %s403 = scalar_select %p402, %s26, 1
        %s404 = smul.addr %s403, 4
        %s405 = smul.addr %s404, 4
        %s406 = scalar_lea.vmem %s5, %s405
      $region48: #{tpu_custom_call.1} parent=31 // pred_fallthru
        _
      // Predicated region
      $region49: #{tpu_custom_call.1} parent=31 // pred_check
        %p407 = pneg %p196
      $region50: #{tpu_custom_call.1} parent=31 // pred_check_branch
        %409 = sbr.rel (%p407) target = $region52
      $region51: #{tpu_custom_call.1} parent=31 // pred_region
        %p410 = scmp.lt.s32.totalorder %s26, 1
        %s411 = scalar_select %p410, %s26, 1
        %s412 = smul.addr %s411, 4
        %s413 = smul.addr %s412, 4
        %s414 = scalar_lea.vmem %s6, %s413
      $region52: #{tpu_custom_call.1} parent=31 // pred_fallthru
        _
      // Predicated region
      $region53: #{tpu_custom_call.1} parent=31 // pred_check
        %p415 = pneg %p222
      $region54: #{tpu_custom_call.1} parent=31 // pred_check_branch
        %417 = sbr.rel (%p415) target = $region56
      $region55: #{tpu_custom_call.1} parent=31 // pred_region
        %p418 = scmp.lt.s32.totalorder %s26, 1
        %s419 = scalar_select %p418, %s26, 1
        %s420 = scalar_lea.vmem %s7, %s419
      $region56: #{tpu_custom_call.1} parent=31 // pred_fallthru
        _
      // Predicated region
      $region57: #{tpu_custom_call.1} parent=31 // pred_check
        %p421 = pneg %p248
      $region58: #{tpu_custom_call.1} parent=31 // pred_check_branch
        %423 = sbr.rel (%p421) target = $region60
      $region59: #{tpu_custom_call.1} parent=31 // pred_region
        %p424 = scmp.lt.s32.totalorder %s26, 1
        %s425 = scalar_select %p424, %s26, 1
        %s426 = smul.addr %s425, 4
        %s427 = smul.addr %s426, 4
        %s428 = scalar_lea.vmem %s8, %s427
      $region60: #{tpu_custom_call.1} parent=31 // pred_fallthru
        _
      // Predicated region
      $region61: #{tpu_custom_call.1} parent=31 // pred_check
        %p429 = pneg %p274
      $region62: #{tpu_custom_call.1} parent=31 // pred_check_branch
        %431 = sbr.rel (%p429) target = $region64
      $region63: #{tpu_custom_call.1} parent=31 // pred_region
        %p432 = scmp.lt.s32.totalorder %s26, 1
        %s433 = scalar_select %p432, %s26, 1
        %s434 = smul.addr %s433, 16
        %s435 = smul.addr %s434, 4
        %s436 = scalar_lea.vmem %s9, %s435
      $region64: #{tpu_custom_call.1} parent=31 // pred_fallthru
        _
    $region32: #{tpu_custom_call.1} parent=5 // pred_fallthru
      _
    %p437 = scmp.le.s32.totalorder 1, %s18
    %p438 = scmp.lt.s32.totalorder %s18, 5
    %p439 = pnand %p437, %p438
    %p440 = pneg %p439
    // Predicated region
    $region65: #{tpu_custom_call.1} parent=5 // pred_check
      _
    $region66: #{tpu_custom_call.1} parent=5 // pred_check_branch
      %442 = sbr.rel (%p439) target = $region68
    $region67: #{tpu_custom_call.1} parent=5 // pred_region
      %s443 = ssub.s32 %s18, 1
      %p444 = scmp.lt.s32.totalorder %s27, 1
      %s445 = scalar_select %p444, %s27, 1
      %s446 = smul.addr %s445, 4
      %s447 = scalar_lea.vmem %s0, %s446
      %p448 = pneg %p56
      %p449 = pneg %p53
      %p450 = scmp.lt.s32.totalorder %s27, 1
      %s451 = scalar_select %p450, %s27, 1
      %s452 = smul.addr %s451, 8
      %s453 = scalar_lea.vmem %s1, %s452
      %p454 = pneg %p82
      %p455 = pneg %p79
      %p456 = pneg %p103
      %p457 = pneg %p100
      %p458 = pneg %p124
      %p459 = pneg %p121
      %p460 = scmp.lt.s32.totalorder %s28, 1
      %s461 = scalar_select %p460, %s28, 1
      %s462 = scalar_lea.vmem %s4, %s461
      %p463 = pneg %p150
      %p464 = pneg %p147
      %p465 = scmp.lt.s32.totalorder %s28, 1
      %s466 = scalar_select %p465, %s28, 1
      %s467 = smul.addr %s466, 4
      %s468 = smul.addr %s467, 4
      %s469 = scalar_lea.vmem %s5, %s468
      %p470 = pneg %p176
      %p471 = pneg %p173
      %p472 = scmp.lt.s32.totalorder %s28, 1
      %s473 = scalar_select %p472, %s28, 1
      %s474 = smul.addr %s473, 4
      %s475 = smul.addr %s474, 4
      %s476 = scalar_lea.vmem %s6, %s475
      %p477 = pneg %p202
      %p478 = pneg %p199
      %p479 = scmp.lt.s32.totalorder %s28, 1
      %s480 = scalar_select %p479, %s28, 1
      %s481 = scalar_lea.vmem %s7, %s480
      %p482 = pneg %p228
      %p483 = pneg %p225
      %p484 = scmp.lt.s32.totalorder %s28, 1
      %s485 = scalar_select %p484, %s28, 1
      %s486 = smul.addr %s485, 4
      %s487 = smul.addr %s486, 4
      %s488 = scalar_lea.vmem %s8, %s487
      %p489 = pneg %p254
      %p490 = pneg %p251
      %p491 = scmp.lt.s32.totalorder %s28, 1
      %s492 = scalar_select %p491, %s28, 1
      %s493 = smul.addr %s492, 16
      %s494 = smul.addr %s493, 4
      %s495 = scalar_lea.vmem %s9, %s494
      %p496 = pneg %p280
      %p497 = pneg %p277
      %p498 = pneg %p301
      %p499 = pneg %p298
      %p500 = pneg %p322
      %p501 = pneg %p319
      %p502 = pneg %p348
      %p503 = pneg %p345
      %p504 = scmp.lt.s32.totalorder %s27, 1
      %s505 = scalar_select %p504, %s27, 1
      %s506 = scalar_lea.vmem %s12, %s505
      %p507 = scmp.lt.s32.totalorder %s27, 1
      %s508 = scalar_select %p507, %s27, 1
      %s509 = smul.addr %s508, 4
      %s510 = scalar_lea.vmem %s0, %s509
      %p511 = scmp.lt.s32.totalorder %s27, 1
      %s512 = scalar_select %p511, %s27, 1
      %s513 = smul.addr %s512, 8
      %s514 = scalar_lea.vmem %s1, %s513
      %p515 = scmp.lt.s32.totalorder %s28, 1
      %s516 = scalar_select %p515, %s28, 1
      %s517 = scalar_lea.vmem %s4, %s516
      %p518 = scmp.lt.s32.totalorder %s28, 1
      %s519 = scalar_select %p518, %s28, 1
      %s520 = smul.addr %s519, 4
      %s521 = smul.addr %s520, 4
      %s522 = scalar_lea.vmem %s5, %s521
      %p523 = scmp.lt.s32.totalorder %s28, 1
      %s524 = scalar_select %p523, %s28, 1
      %s525 = smul.addr %s524, 4
      %s526 = smul.addr %s525, 4
      %s527 = scalar_lea.vmem %s6, %s526
      %p528 = scmp.lt.s32.totalorder %s28, 1
      %s529 = scalar_select %p528, %s28, 1
      %s530 = scalar_lea.vmem %s7, %s529
      %p531 = scmp.lt.s32.totalorder %s28, 1
      %s532 = scalar_select %p531, %s28, 1
      %s533 = smul.addr %s532, 4
      %s534 = smul.addr %s533, 4
      %s535 = scalar_lea.vmem %s8, %s534
      %p536 = scmp.lt.s32.totalorder %s28, 1
      %s537 = scalar_select %p536, %s28, 1
      %s538 = smul.addr %s537, 16
      %s539 = smul.addr %s538, 4
      %s540 = scalar_lea.vmem %s9, %s539
      %p541 = scmp.lt.s32.totalorder %s27, 1
      %s542 = scalar_select %p541, %s27, 1
      %s543 = scalar_lea.vmem %s12, %s542
      %p545 = scmp.eq.s32.totalorder %s28, 0
      // Predicated region
      $region69: #{tpu_custom_call.1} parent=67 // pred_check
        %p546 = pneg %p545
      $region70: #{tpu_custom_call.1} parent=67 // pred_check_branch
        %548 = sbr.rel (%p546) target = $region72
      $region71: #{tpu_custom_call.1} parent=67 // pred_region
        %v549 = vld [vmem:[%s510] sm:$0xf]
        %v550 = vld [vmem:[%s3] sm:$0x3]
        %v551 = vld [vmem:[%s2] sm:$0xff]
        %vm552 = vcmask 31744
        %v554 = vsel %vm552, %v549, 0
        %vm556 = vcmask 1041408
        %v558 = vsel %vm556, %v550, 0
        %560 = vmatprep.subr.bf16.mxu0 0
        %561 = vmatpush1.bf16.msra.mxu0 %v558
        %562 = vmatprep.subr.bf16.mxu0 0
        %563 = vmatpush1.bf16.msra.mxu0 0
        %564 = vmatprep.subr.bf16.mxu0 0
        %565 = vmatpush1.bf16.msra.mxu0 0
        %566 = vmatprep.subr.bf16.mxu0 0
        %567 = vmatpush1.bf16.msra.mxu0 0
        %568 = vmatprep.subr.bf16.mxu0 0
        %569 = vmatpush1.bf16.msra.mxu0 0
        %570 = vmatprep.subr.bf16.mxu0 0
        %571 = vmatpush1.bf16.msra.mxu0 0
        %572 = vmatprep.subr.bf16.mxu0 0
        %573 = vmatpush1.bf16.msra.mxu0 0
        %574 = vmatprep.subr.bf16.mxu0 0
        %575 = vmatpush1.bf16.msra.mxu0 0
        %576 = vmatprep.subr.bf16.mxu0 0
        %577 = vmatpush1.bf16.msra.mxu0 0
        %578 = vmatprep.subr.bf16.mxu0 0
        %579 = vmatpush1.bf16.msra.mxu0 0
        %580 = vmatprep.subr.bf16.mxu0 0
        %581 = vmatpush1.bf16.msra.mxu0 0
        %582 = vmatprep.subr.bf16.mxu0 0
        %583 = vmatpush1.bf16.msra.mxu0 0
        %584 = vmatprep.subr.bf16.mxu0 0
        %585 = vmatpush1.bf16.msra.mxu0 0
        %586 = vmatprep.subr.bf16.mxu0 0
        %587 = vmatpush1.bf16.msra.mxu0 0
        %588 = vmatprep.subr.bf16.mxu0 0
        %589 = vmatpush1.bf16.msra.mxu0 0
        %590 = vmatprep.subr.bf16.mxu0 0
        %591 = vmatpush1.bf16.msra.mxu0 0
        %592 = vmatprep.mubr.bf16.mxu0 0
        %593 = vmatmul.mubr.bf16.gmra.mrb[0].mxu0 %v554
        %v594 = vpop.f32.mrb[0].mxu0
        %v595 = vadd.f32 %v551, %v594
        %v596 = vpop.f32.mrb[0].mxu0
        %v597 = vpop.f32.mrb[0].mxu0
        %v598 = vpop.f32.mrb[0].mxu0
        %599 = vdwg.mxu0
        %vm600 = vcmask 261120
        %601 = vst.msk [vmem:[#allocation2] sm:$0xff] %vm600, %v595
      $region72: #{tpu_custom_call.1} parent=67 // pred_fallthru
        _
      %v602 = vld [vmem:[#allocation2] sm:$0xff]
      %v603 = vlaneseq
      %v604 = vshrl.u32 %v603, 7
      %v605 = vlaneseq
      %v606 = vand.u32 %v605, 127
      %vm607 = vcmp.ge.s32.totalorder %v604, %v606
      %v608 = vld [vmem:[%s517] sm:$0x1]
      %vm609 = vcmask 261120
      %v610 = vsel %vm609, %v602, 0.0
      %611 = vadd.xlane.f32.xlu0 %v610
      %v612 = vpop.xlane.xlu0 %611
      %v613 = vrcp.pop 32.0
      %v614 = vmul.f32 %v612, %v613
      %v615 = vsub.f32 %v602, %v614
      %v616 = vmul.f32 %v615, %v615
      %v617 = vsel %vm609, %v616, 0.0
      %618 = vadd.xlane.f32.xlu0 %v617
      %v619 = vpop.xlane.xlu0 %618
      %v620 = vmul.f32 %v619, %v613
      %v621 = vadd.f32 %v620, 1e-05
      %v622 = vrsqrt.pop %v621
      %v623 = vmul.f32 %v615, %v622
      %v625 = vlaneseq
      %v626 = vshrl.u32 %v625, 7
      %v627 = vsub.s32 0, %v626
      %v628 = vrot.slane %v608, %v627
      %v630 = vmul.f32 %v623, %v628
      %v631 = vpack.c.bf16 %v630, %v630
      %v632 = vld [vmem:[%s522] sm:$0xf]
      %v633 = vld [vmem:[%s522 + $0x4] sm:$0xf]
      %v634 = vld [vmem:[%s522 + $0x8] sm:$0xf]
      %v635 = vld [vmem:[%s522 + $0xc] sm:$0xf]
      %v640 = vunpack.c.l.b16 %v632
      %v641 = vunpack.c.l.b16 %v633
      %v642 = vunpack.c.l.b16 %v634
      %v643 = vunpack.c.l.b16 %v635
      %v644 = vpack.c.b16 %v641, %v640
      %v645 = vpack.c.b16 %v643, %v642
      %v649 = vsel %vm609, %v631, 0
      %651 = vmatprep.subr.bf16.mxu0 0
      %652 = vmatpush1.bf16.msra.mxu0 %v644
      %653 = vmatprep.subr.bf16.mxu0 0
      %654 = vmatpush1.bf16.msra.mxu0 %v645
      %655 = vmatprep.subr.bf16.mxu0 0
      %656 = vmatpush1.bf16.msra.mxu0 0
      %657 = vmatprep.subr.bf16.mxu0 0
      %658 = vmatpush1.bf16.msra.mxu0 0
      %659 = vmatprep.subr.bf16.mxu0 0
      %660 = vmatpush1.bf16.msra.mxu0 0
      %661 = vmatprep.subr.bf16.mxu0 0
      %662 = vmatpush1.bf16.msra.mxu0 0
      %663 = vmatprep.subr.bf16.mxu0 0
      %664 = vmatpush1.bf16.msra.mxu0 0
      %665 = vmatprep.subr.bf16.mxu0 0
      %666 = vmatpush1.bf16.msra.mxu0 0
      %667 = vmatprep.subr.bf16.mxu0 0
      %668 = vmatpush1.bf16.msra.mxu0 0
      %669 = vmatprep.subr.bf16.mxu0 0
      %670 = vmatpush1.bf16.msra.mxu0 0
      %671 = vmatprep.subr.bf16.mxu0 0
      %672 = vmatpush1.bf16.msra.mxu0 0
      %673 = vmatprep.subr.bf16.mxu0 0
      %674 = vmatpush1.bf16.msra.mxu0 0
      %675 = vmatprep.subr.bf16.mxu0 0
      %676 = vmatpush1.bf16.msra.mxu0 0
      %677 = vmatprep.subr.bf16.mxu0 0
      %678 = vmatpush1.bf16.msra.mxu0 0
      %679 = vmatprep.subr.bf16.mxu0 0
      %680 = vmatpush1.bf16.msra.mxu0 0
      %681 = vmatprep.subr.bf16.mxu0 0
      %682 = vmatpush1.bf16.msra.mxu0 0
      %683 = vmatprep.mubr.bf16.mxu0 0
      %684 = vmatmul.mubr.bf16.gmra.mrb[0].mxu0 %v649
      %v685 = vpop.f32.mrb[0].mxu0
      %v686 = vadd.f32 0.0, %v685
      %v687 = vpop.f32.mrb[0].mxu0
      %v688 = vpop.f32.mrb[0].mxu0
      %v689 = vpop.f32.mrb[0].mxu0
      %690 = vdwg.mxu0
      %v691 = vmul.f32 %v686, 0.35355338
      %v692 = vpack.c.bf16 %v691, %v691
      %v693 = vpack.c.bf16 %v686, %v686
      %695 = vrot.lane.b32.xlu0 %v693, 96
      %v696 = vpop.permute.xlu0 %695
      %vm697 = vcmask 64512
      %v699 = vsel %vm697, %v692, 0
      %v702 = vsel %vm697, %v696, 0
      %704 = vmatprep.subr.bf16.mxu0 0
      %705 = vmatpush1.bf16.xpose.msra.mxu0 %v702
      %706 = vmatprep.subr.bf16.mxu0 0
      %707 = vmatpush1.bf16.xpose.msra.mxu0 0
      %708 = vmatprep.subr.bf16.mxu0 0
      %709 = vmatpush1.bf16.xpose.msra.mxu0 0
      %710 = vmatprep.subr.bf16.mxu0 0
      %711 = vmatpush1.bf16.xpose.msra.mxu0 0
      %712 = vmatprep.subr.bf16.mxu0 0
      %713 = vmatpush1.bf16.xpose.msra.mxu0 0
      %714 = vmatprep.subr.bf16.mxu0 0
      %715 = vmatpush1.bf16.xpose.msra.mxu0 0
      %716 = vmatprep.subr.bf16.mxu0 0
      %717 = vmatpush1.bf16.xpose.msra.mxu0 0
      %718 = vmatprep.subr.bf16.mxu0 0
      %719 = vmatpush1.bf16.xpose.msra.mxu0 0
      %720 = vmatprep.subr.bf16.mxu0 0
      %721 = vmatpush1.bf16.xpose.msra.mxu0 0
      %722 = vmatprep.subr.bf16.mxu0 0
      %723 = vmatpush1.bf16.xpose.msra.mxu0 0
      %724 = vmatprep.subr.bf16.mxu0 0
      %725 = vmatpush1.bf16.xpose.msra.mxu0 0
      %726 = vmatprep.subr.bf16.mxu0 0
      %727 = vmatpush1.bf16.xpose.msra.mxu0 0
      %728 = vmatprep.subr.bf16.mxu0 0
      %729 = vmatpush1.bf16.xpose.msra.mxu0 0
      %730 = vmatprep.subr.bf16.mxu0 0
      %731 = vmatpush1.bf16.xpose.msra.mxu0 0
      %732 = vmatprep.subr.bf16.mxu0 0
      %733 = vmatpush1.bf16.xpose.msra.mxu0 0
      %734 = vmatprep.subr.bf16.mxu0 0
      %735 = vmatpush1.bf16.xpose.msra.mxu0 0
      %736 = vmatprep.mubr.bf16.mxu0 0
      %737 = vmatmul.mubr.bf16.gmra.mrb[0].mxu0 %v699
      %v738 = vpop.f32.mrb[0].mxu0
      %v739 = vadd.f32 0.0, %v738
      %v740 = vpop.f32.mrb[0].mxu0
      %v741 = vpop.f32.mrb[0].mxu0
      %v742 = vpop.f32.mrb[0].mxu0
      %743 = vdwg.mxu0
      %v744 = vsel %vm607, %v739, -1e+30
      %v745 = vsel %vm697, %v744, -inf
      %746 = vmax.xlane.f32.xlu0 %v745
      %v747 = vpop.xlane.xlu0 %746
      %v748 = vsub.f32 %v744, %v747
      %v749 = vmul.f32 %v748, 1.442695
      %v750 = vpow.pop %v749
      %v751 = vsel %vm697, %v750, 0.0
      %752 = vadd.xlane.f32.xlu0 %v751
      %v753 = vpop.xlane.xlu0 %752
      %v754 = vrcp.pop %v753
      %v755 = vmul.f32 %v750, %v754
      %v756 = vpack.c.bf16 %v755, %v755
      %757 = vrot.lane.b32.xlu0 %v693, 64
      %v758 = vpop.permute.xlu0 %757
      %v760 = vsel %vm697, %v756, 0
      %vm762 = vcmask 1043456
      %v764 = vsel %vm762, %v758, 0
      %766 = vmatprep.subr.bf16.mxu0 0
      %767 = vmatpush1.bf16.msra.mxu0 %v764
      %768 = vmatprep.subr.bf16.mxu0 0
      %769 = vmatpush1.bf16.msra.mxu0 0
      %770 = vmatprep.subr.bf16.mxu0 0
      %771 = vmatpush1.bf16.msra.mxu0 0
      %772 = vmatprep.subr.bf16.mxu0 0
      %773 = vmatpush1.bf16.msra.mxu0 0
      %774 = vmatprep.subr.bf16.mxu0 0
      %775 = vmatpush1.bf16.msra.mxu0 0
      %776 = vmatprep.subr.bf16.mxu0 0
      %777 = vmatpush1.bf16.msra.mxu0 0
      %778 = vmatprep.subr.bf16.mxu0 0
      %779 = vmatpush1.bf16.msra.mxu0 0
      %780 = vmatprep.subr.bf16.mxu0 0
      %781 = vmatpush1.bf16.msra.mxu0 0
      %782 = vmatprep.subr.bf16.mxu0 0
      %783 = vmatpush1.bf16.msra.mxu0 0
      %784 = vmatprep.subr.bf16.mxu0 0
      %785 = vmatpush1.bf16.msra.mxu0 0
      %786 = vmatprep.subr.bf16.mxu0 0
      %787 = vmatpush1.bf16.msra.mxu0 0
      %788 = vmatprep.subr.bf16.mxu0 0
      %789 = vmatpush1.bf16.msra.mxu0 0
      %790 = vmatprep.subr.bf16.mxu0 0
      %791 = vmatpush1.bf16.msra.mxu0 0
      %792 = vmatprep.subr.bf16.mxu0 0
      %793 = vmatpush1.bf16.msra.mxu0 0
      %794 = vmatprep.subr.bf16.mxu0 0
      %795 = vmatpush1.bf16.msra.mxu0 0
      %796 = vmatprep.subr.bf16.mxu0 0
      %797 = vmatpush1.bf16.msra.mxu0 0
      %798 = vmatprep.mubr.bf16.mxu0 0
      %799 = vmatmul.mubr.bf16.gmra.mrb[0].mxu0 %v760
      %v800 = vpop.f32.mrb[0].mxu0
      %v801 = vadd.f32 0.0, %v800
      %v802 = vpop.f32.mrb[0].mxu0
      %v803 = vpop.f32.mrb[0].mxu0
      %v804 = vpop.f32.mrb[0].mxu0
      %805 = vdwg.mxu0
      %806 = vst.msk [vmem:[#allocation3] sm:$0xff] %vm697, %v801
      %808 = vrot.lane.b32.xlu0 %v692, 120
      %v809 = vpop.permute.xlu0 %808
      %810 = vrot.lane.b32.xlu0 %v693, 88
      %v811 = vpop.permute.xlu0 %810
      %v813 = vsel %vm697, %v809, 0
      %v816 = vsel %vm697, %v811, 0
      %818 = vmatprep.subr.bf16.mxu0 0
      %819 = vmatpush1.bf16.xpose.msra.mxu0 %v816
      %820 = vmatprep.subr.bf16.mxu0 0
      %821 = vmatpush1.bf16.xpose.msra.mxu0 0
      %822 = vmatprep.subr.bf16.mxu0 0
      %823 = vmatpush1.bf16.xpose.msra.mxu0 0
      %824 = vmatprep.subr.bf16.mxu0 0
      %825 = vmatpush1.bf16.xpose.msra.mxu0 0
      %826 = vmatprep.subr.bf16.mxu0 0
      %827 = vmatpush1.bf16.xpose.msra.mxu0 0
      %828 = vmatprep.subr.bf16.mxu0 0
      %829 = vmatpush1.bf16.xpose.msra.mxu0 0
      %830 = vmatprep.subr.bf16.mxu0 0
      %831 = vmatpush1.bf16.xpose.msra.mxu0 0
      %832 = vmatprep.subr.bf16.mxu0 0
      %833 = vmatpush1.bf16.xpose.msra.mxu0 0
      %834 = vmatprep.subr.bf16.mxu0 0
      %835 = vmatpush1.bf16.xpose.msra.mxu0 0
      %836 = vmatprep.subr.bf16.mxu0 0
      %837 = vmatpush1.bf16.xpose.msra.mxu0 0
      %838 = vmatprep.subr.bf16.mxu0 0
      %839 = vmatpush1.bf16.xpose.msra.mxu0 0
      %840 = vmatprep.subr.bf16.mxu0 0
      %841 = vmatpush1.bf16.xpose.msra.mxu0 0
      %842 = vmatprep.subr.bf16.mxu0 0
      %843 = vmatpush1.bf16.xpose.msra.mxu0 0
      %844 = vmatprep.subr.bf16.mxu0 0
      %845 = vmatpush1.bf16.xpose.msra.mxu0 0
      %846 = vmatprep.subr.bf16.mxu0 0
      %847 = vmatpush1.bf16.xpose.msra.mxu0 0
      %848 = vmatprep.subr.bf16.mxu0 0
      %849 = vmatpush1.bf16.xpose.msra.mxu0 0
      %850 = vmatprep.mubr.bf16.mxu0 0
      %851 = vmatmul.mubr.bf16.gmra.mrb[0].mxu0 %v813
      %v852 = vpop.f32.mrb[0].mxu0
      %v853 = vadd.f32 0.0, %v852
      %v854 = vpop.f32.mrb[0].mxu0
      %v855 = vpop.f32.mrb[0].mxu0
      %v856 = vpop.f32.mrb[0].mxu0
      %857 = vdwg.mxu0
      %v858 = vsel %vm607, %v853, -1e+30
      %v859 = vsel %vm697, %v858, -inf
      %860 = vmax.xlane.f32.xlu0 %v859
      %v861 = vpop.xlane.xlu0 %860
      %v862 = vsub.f32 %v858, %v861
      %v863 = vmul.f32 %v862, 1.442695
      %v864 = vpow.pop %v863
      %v865 = vsel %vm697, %v864, 0.0
      %866 = vadd.xlane.f32.xlu0 %v865
      %v867 = vpop.xlane.xlu0 %866
      %v868 = vrcp.pop %v867
      %v869 = vmul.f32 %v864, %v868
      %v870 = vpack.c.bf16 %v869, %v869
      %871 = vrot.lane.b32.xlu0 %v693, 56
      %v872 = vpop.permute.xlu0 %871
      %v874 = vsel %vm697, %v870, 0
      %v877 = vsel %vm762, %v872, 0
      %879 = vmatprep.subr.bf16.mxu0 0
      %880 = vmatpush1.bf16.msra.mxu0 %v877
      %881 = vmatprep.subr.bf16.mxu0 0
      %882 = vmatpush1.bf16.msra.mxu0 0
      %883 = vmatprep.subr.bf16.mxu0 0
      %884 = vmatpush1.bf16.msra.mxu0 0
      %885 = vmatprep.subr.bf16.mxu0 0
      %886 = vmatpush1.bf16.msra.mxu0 0
      %887 = vmatprep.subr.bf16.mxu0 0
      %888 = vmatpush1.bf16.msra.mxu0 0
      %889 = vmatprep.subr.bf16.mxu0 0
      %890 = vmatpush1.bf16.msra.mxu0 0
      %891 = vmatprep.subr.bf16.mxu0 0
      %892 = vmatpush1.bf16.msra.mxu0 0
      %893 = vmatprep.subr.bf16.mxu0 0
      %894 = vmatpush1.bf16.msra.mxu0 0
      %895 = vmatprep.subr.bf16.mxu0 0
      %896 = vmatpush1.bf16.msra.mxu0 0
      %897 = vmatprep.subr.bf16.mxu0 0
      %898 = vmatpush1.bf16.msra.mxu0 0
      %899 = vmatprep.subr.bf16.mxu0 0
      %900 = vmatpush1.bf16.msra.mxu0 0
      %901 = vmatprep.subr.bf16.mxu0 0
      %902 = vmatpush1.bf16.msra.mxu0 0
      %903 = vmatprep.subr.bf16.mxu0 0
      %904 = vmatpush1.bf16.msra.mxu0 0
      %905 = vmatprep.subr.bf16.mxu0 0
      %906 = vmatpush1.bf16.msra.mxu0 0
      %907 = vmatprep.subr.bf16.mxu0 0
      %908 = vmatpush1.bf16.msra.mxu0 0
      %909 = vmatprep.subr.bf16.mxu0 0
      %910 = vmatpush1.bf16.msra.mxu0 0
      %911 = vmatprep.mubr.bf16.mxu0 0
      %912 = vmatmul.mubr.bf16.gmra.mrb[0].mxu0 %v874
      %v913 = vpop.f32.mrb[0].mxu0
      %v914 = vadd.f32 0.0, %v913
      %v915 = vpop.f32.mrb[0].mxu0
      %v916 = vpop.f32.mrb[0].mxu0
      %v917 = vpop.f32.mrb[0].mxu0
      %918 = vdwg.mxu0
      %920 = vrot.lane.b32.xlu0 %v914, 8
      %v921 = vpop.permute.xlu0 %920
      %vm923 = vcmask 130112
      %924 = vst.msk [vmem:[#allocation3] sm:$0xff] %vm923, %v921
      %925 = vrot.lane.b32.xlu0 %v692, 112
      %v926 = vpop.permute.xlu0 %925
      %927 = vrot.lane.b32.xlu0 %v693, 80
      %v928 = vpop.permute.xlu0 %927
      %v930 = vsel %vm697, %v926, 0
      %v933 = vsel %vm697, %v928, 0
      %935 = vmatprep.subr.bf16.mxu0 0
      %936 = vmatpush1.bf16.xpose.msra.mxu0 %v933
      %937 = vmatprep.subr.bf16.mxu0 0
      %938 = vmatpush1.bf16.xpose.msra.mxu0 0
      %939 = vmatprep.subr.bf16.mxu0 0
      %940 = vmatpush1.bf16.xpose.msra.mxu0 0
      %941 = vmatprep.subr.bf16.mxu0 0
      %942 = vmatpush1.bf16.xpose.msra.mxu0 0
      %943 = vmatprep.subr.bf16.mxu0 0
      %944 = vmatpush1.bf16.xpose.msra.mxu0 0
      %945 = vmatprep.subr.bf16.mxu0 0
      %946 = vmatpush1.bf16.xpose.msra.mxu0 0
      %947 = vmatprep.subr.bf16.mxu0 0
      %948 = vmatpush1.bf16.xpose.msra.mxu0 0
      %949 = vmatprep.subr.bf16.mxu0 0
      %950 = vmatpush1.bf16.xpose.msra.mxu0 0
      %951 = vmatprep.subr.bf16.mxu0 0
      %952 = vmatpush1.bf16.xpose.msra.mxu0 0
      %953 = vmatprep.subr.bf16.mxu0 0
      %954 = vmatpush1.bf16.xpose.msra.mxu0 0
      %955 = vmatprep.subr.bf16.mxu0 0
      %956 = vmatpush1.bf16.xpose.msra.mxu0 0
      %957 = vmatprep.subr.bf16.mxu0 0
      %958 = vmatpush1.bf16.xpose.msra.mxu0 0
      %959 = vmatprep.subr.bf16.mxu0 0
      %960 = vmatpush1.bf16.xpose.msra.mxu0 0
      %961 = vmatprep.subr.bf16.mxu0 0
      %962 = vmatpush1.bf16.xpose.msra.mxu0 0
      %963 = vmatprep.subr.bf16.mxu0 0
      %964 = vmatpush1.bf16.xpose.msra.mxu0 0
      %965 = vmatprep.subr.bf16.mxu0 0
      %966 = vmatpush1.bf16.xpose.msra.mxu0 0
      %967 = vmatprep.mubr.bf16.mxu0 0
      %968 = vmatmul.mubr.bf16.gmra.mrb[0].mxu0 %v930
      %v969 = vpop.f32.mrb[0].mxu0
      %v970 = vadd.f32 0.0, %v969
      %v971 = vpop.f32.mrb[0].mxu0
      %v972 = vpop.f32.mrb[0].mxu0
      %v973 = vpop.f32.mrb[0].mxu0
      %974 = vdwg.mxu0
      %v975 = vsel %vm607, %v970, -1e+30
      %v976 = vsel %vm697, %v975, -inf
      %977 = vmax.xlane.f32.xlu0 %v976
      %v978 = vpop.xlane.xlu0 %977
      %v979 = vsub.f32 %v975, %v978
      %v980 = vmul.f32 %v979, 1.442695
      %v981 = vpow.pop %v980
      %v982 = vsel %vm697, %v981, 0.0
      %983 = vadd.xlane.f32.xlu0 %v982
      %v984 = vpop.xlane.xlu0 %983
      %v985 = vrcp.pop %v984
      %v986 = vmul.f32 %v981, %v985
      %v987 = vpack.c.bf16 %v986, %v986
      %988 = vrot.lane.b32.xlu0 %v693, 48
      %v989 = vpop.permute.xlu0 %988
      %v991 = vsel %vm697, %v987, 0
      %v994 = vsel %vm762, %v989, 0
      %996 = vmatprep.subr.bf16.mxu0 0
      %997 = vmatpush1.bf16.msra.mxu0 %v994
      %998 = vmatprep.subr.bf16.mxu0 0
      %999 = vmatpush1.bf16.msra.mxu0 0
      %1000 = vmatprep.subr.bf16.mxu0 0
      %1001 = vmatpush1.bf16.msra.mxu0 0
      %1002 = vmatprep.subr.bf16.mxu0 0
      %1003 = vmatpush1.bf16.msra.mxu0 0
      %1004 = vmatprep.subr.bf16.mxu0 0
      %1005 = vmatpush1.bf16.msra.mxu0 0
      %1006 = vmatprep.subr.bf16.mxu0 0
      %1007 = vmatpush1.bf16.msra.mxu0 0
      %1008 = vmatprep.subr.bf16.mxu0 0
      %1009 = vmatpush1.bf16.msra.mxu0 0
      %1010 = vmatprep.subr.bf16.mxu0 0
      %1011 = vmatpush1.bf16.msra.mxu0 0
      %1012 = vmatprep.subr.bf16.mxu0 0
      %1013 = vmatpush1.bf16.msra.mxu0 0
      %1014 = vmatprep.subr.bf16.mxu0 0
      %1015 = vmatpush1.bf16.msra.mxu0 0
      %1016 = vmatprep.subr.bf16.mxu0 0
      %1017 = vmatpush1.bf16.msra.mxu0 0
      %1018 = vmatprep.subr.bf16.mxu0 0
      %1019 = vmatpush1.bf16.msra.mxu0 0
      %1020 = vmatprep.subr.bf16.mxu0 0
      %1021 = vmatpush1.bf16.msra.mxu0 0
      %1022 = vmatprep.subr.bf16.mxu0 0
      %1023 = vmatpush1.bf16.msra.mxu0 0
      %1024 = vmatprep.subr.bf16.mxu0 0
      %1025 = vmatpush1.bf16.msra.mxu0 0
      %1026 = vmatprep.subr.bf16.mxu0 0
      %1027 = vmatpush1.bf16.msra.mxu0 0
      %1028 = vmatprep.mubr.bf16.mxu0 0
      %1029 = vmatmul.mubr.bf16.gmra.mrb[0].mxu0 %v991
      %v1030 = vpop.f32.mrb[0].mxu0
      %v1031 = vadd.f32 0.0, %v1030
      %v1032 = vpop.f32.mrb[0].mxu0
      %v1033 = vpop.f32.mrb[0].mxu0
      %v1034 = vpop.f32.mrb[0].mxu0
      %1035 = vdwg.mxu0
      %1037 = vrot.lane.b32.xlu0 %v1031, 16
      %v1038 = vpop.permute.xlu0 %1037
      %vm1040 = vcmask 195712
      %1041 = vst.msk [vmem:[#allocation3] sm:$0xff] %vm1040, %v1038
      %1042 = vrot.lane.b32.xlu0 %v692, 104
      %v1043 = vpop.permute.xlu0 %1042
      %1044 = vrot.lane.b32.xlu0 %v693, 72
      %v1045 = vpop.permute.xlu0 %1044
      %v1047 = vsel %vm697, %v1043, 0
      %v1050 = vsel %vm697, %v1045, 0
      %1052 = vmatprep.subr.bf16.mxu0 0
      %1053 = vmatpush1.bf16.xpose.msra.mxu0 %v1050
      %1054 = vmatprep.subr.bf16.mxu0 0
      %1055 = vmatpush1.bf16.xpose.msra.mxu0 0
      %1056 = vmatprep.subr.bf16.mxu0 0
      %1057 = vmatpush1.bf16.xpose.msra.mxu0 0
      %1058 = vmatprep.subr.bf16.mxu0 0
      %1059 = vmatpush1.bf16.xpose.msra.mxu0 0
      %1060 = vmatprep.subr.bf16.mxu0 0
      %1061 = vmatpush1.bf16.xpose.msra.mxu0 0
      %1062 = vmatprep.subr.bf16.mxu0 0
      %1063 = vmatpush1.bf16.xpose.msra.mxu0 0
      %1064 = vmatprep.subr.bf16.mxu0 0
      %1065 = vmatpush1.bf16.xpose.msra.mxu0 0
      %1066 = vmatprep.subr.bf16.mxu0 0
      %1067 = vmatpush1.bf16.xpose.msra.mxu0 0
      %1068 = vmatprep.subr.bf16.mxu0 0
      %1069 = vmatpush1.bf16.xpose.msra.mxu0 0
      %1070 = vmatprep.subr.bf16.mxu0 0
      %1071 = vmatpush1.bf16.xpose.msra.mxu0 0
      %1072 = vmatprep.subr.bf16.mxu0 0
      %1073 = vmatpush1.bf16.xpose.msra.mxu0 0
      %1074 = vmatprep.subr.bf16.mxu0 0
      %1075 = vmatpush1.bf16.xpose.msra.mxu0 0
      %1076 = vmatprep.subr.bf16.mxu0 0
      %1077 = vmatpush1.bf16.xpose.msra.mxu0 0
      %1078 = vmatprep.subr.bf16.mxu0 0
      %1079 = vmatpush1.bf16.xpose.msra.mxu0 0
      %1080 = vmatprep.subr.bf16.mxu0 0
      %1081 = vmatpush1.bf16.xpose.msra.mxu0 0
      %1082 = vmatprep.subr.bf16.mxu0 0
      %1083 = vmatpush1.bf16.xpose.msra.mxu0 0
      %1084 = vmatprep.mubr.bf16.mxu0 0
      %1085 = vmatmul.mubr.bf16.gmra.mrb[0].mxu0 %v1047
      %v1086 = vpop.f32.mrb[0].mxu0
      %v1087 = vadd.f32 0.0, %v1086
      %v1088 = vpop.f32.mrb[0].mxu0
      %v1089 = vpop.f32.mrb[0].mxu0
      %v1090 = vpop.f32.mrb[0].mxu0
      %1091 = vdwg.mxu0
      %v1092 = vsel %vm607, %v1087, -1e+30
      %v1093 = vsel %vm697, %v1092, -inf
      %1094 = vmax.xlane.f32.xlu0 %v1093
      %v1095 = vpop.xlane.xlu0 %1094
      %v1096 = vsub.f32 %v1092, %v1095
      %v1097 = vmul.f32 %v1096, 1.442695
      %v1098 = vpow.pop %v1097
      %v1099 = vsel %vm697, %v1098, 0.0
      %1100 = vadd.xlane.f32.xlu0 %v1099
      %v1101 = vpop.xlane.xlu0 %1100
      %v1102 = vrcp.pop %v1101
      %v1103 = vmul.f32 %v1098, %v1102
      %v1104 = vpack.c.bf16 %v1103, %v1103
      %1105 = vrot.lane.b32.xlu0 %v693, 40
      %v1106 = vpop.permute.xlu0 %1105
      %v1108 = vsel %vm697, %v1104, 0
      %v1111 = vsel %vm762, %v1106, 0
      %1113 = vmatprep.subr.bf16.mxu0 0
      %1114 = vmatpush1.bf16.msra.mxu0 %v1111
      %1115 = vmatprep.subr.bf16.mxu0 0
      %1116 = vmatpush1.bf16.msra.mxu0 0
      %1117 = vmatprep.subr.bf16.mxu0 0
      %1118 = vmatpush1.bf16.msra.mxu0 0
      %1119 = vmatprep.subr.bf16.mxu0 0
      %1120 = vmatpush1.bf16.msra.mxu0 0
      %1121 = vmatprep.subr.bf16.mxu0 0
      %1122 = vmatpush1.bf16.msra.mxu0 0
      %1123 = vmatprep.subr.bf16.mxu0 0
      %1124 = vmatpush1.bf16.msra.mxu0 0
      %1125 = vmatprep.subr.bf16.mxu0 0
      %1126 = vmatpush1.bf16.msra.mxu0 0
      %1127 = vmatprep.subr.bf16.mxu0 0
      %1128 = vmatpush1.bf16.msra.mxu0 0
      %1129 = vmatprep.subr.bf16.mxu0 0
      %1130 = vmatpush1.bf16.msra.mxu0 0
      %1131 = vmatprep.subr.bf16.mxu0 0
      %1132 = vmatpush1.bf16.msra.mxu0 0
      %1133 = vmatprep.subr.bf16.mxu0 0
      %1134 = vmatpush1.bf16.msra.mxu0 0
      %1135 = vmatprep.subr.bf16.mxu0 0
      %1136 = vmatpush1.bf16.msra.mxu0 0
      %1137 = vmatprep.subr.bf16.mxu0 0
      %1138 = vmatpush1.bf16.msra.mxu0 0
      %1139 = vmatprep.subr.bf16.mxu0 0
      %1140 = vmatpush1.bf16.msra.mxu0 0
      %1141 = vmatprep.subr.bf16.mxu0 0
      %1142 = vmatpush1.bf16.msra.mxu0 0
      %1143 = vmatprep.subr.bf16.mxu0 0
      %1144 = vmatpush1.bf16.msra.mxu0 0
      %1145 = vmatprep.mubr.bf16.mxu0 0
      %1146 = vmatmul.mubr.bf16.gmra.mrb[0].mxu0 %v1108
      %v1147 = vpop.f32.mrb[0].mxu0
      %v1148 = vadd.f32 0.0, %v1147
      %v1149 = vpop.f32.mrb[0].mxu0
      %v1150 = vpop.f32.mrb[0].mxu0
      %v1151 = vpop.f32.mrb[0].mxu0
      %1152 = vdwg.mxu0
      %1154 = vrot.lane.b32.xlu0 %v1148, 24
      %v1155 = vpop.permute.xlu0 %1154
      %vm1157 = vcmask 261312
      %1158 = vst.msk [vmem:[#allocation3] sm:$0xff] %vm1157, %v1155
      %v1159 = vld [vmem:[#allocation3] sm:$0xff]
      %v1160 = vpack.c.bf16 %v1159, %v1159
      %v1161 = vld [vmem:[%s527] sm:$0xf]
      %v1162 = vld [vmem:[%s527 + $0x4] sm:$0xf]
      %v1163 = vld [vmem:[%s527 + $0x8] sm:$0xf]
      %v1164 = vld [vmem:[%s527 + $0xc] sm:$0xf]
      %v1169 = vunpack.c.l.b16 %v1161
      %v1170 = vunpack.c.l.b16 %v1162
      %v1171 = vunpack.c.l.b16 %v1163
      %v1172 = vunpack.c.l.b16 %v1164
      %v1173 = vpack.c.b16 %v1170, %v1169
      %v1174 = vpack.c.b16 %v1172, %v1171
      %v1178 = vsel %vm609, %v1160, 0
      %1180 = vmatprep.subr.bf16.mxu0 0
      %1181 = vmatpush1.bf16.msra.mxu0 %v1173
      %1182 = vmatprep.subr.bf16.mxu0 0
      %1183 = vmatpush1.bf16.msra.mxu0 %v1174
      %1184 = vmatprep.subr.bf16.mxu0 0
      %1185 = vmatpush1.bf16.msra.mxu0 0
      %1186 = vmatprep.subr.bf16.mxu0 0
      %1187 = vmatpush1.bf16.msra.mxu0 0
      %1188 = vmatprep.subr.bf16.mxu0 0
      %1189 = vmatpush1.bf16.msra.mxu0 0
      %1190 = vmatprep.subr.bf16.mxu0 0
      %1191 = vmatpush1.bf16.msra.mxu0 0
      %1192 = vmatprep.subr.bf16.mxu0 0
      %1193 = vmatpush1.bf16.msra.mxu0 0
      %1194 = vmatprep.subr.bf16.mxu0 0
      %1195 = vmatpush1.bf16.msra.mxu0 0
      %1196 = vmatprep.subr.bf16.mxu0 0
      %1197 = vmatpush1.bf16.msra.mxu0 0
      %1198 = vmatprep.subr.bf16.mxu0 0
      %1199 = vmatpush1.bf16.msra.mxu0 0
      %1200 = vmatprep.subr.bf16.mxu0 0
      %1201 = vmatpush1.bf16.msra.mxu0 0
      %1202 = vmatprep.subr.bf16.mxu0 0
      %1203 = vmatpush1.bf16.msra.mxu0 0
      %1204 = vmatprep.subr.bf16.mxu0 0
      %1205 = vmatpush1.bf16.msra.mxu0 0
      %1206 = vmatprep.subr.bf16.mxu0 0
      %1207 = vmatpush1.bf16.msra.mxu0 0
      %1208 = vmatprep.subr.bf16.mxu0 0
      %1209 = vmatpush1.bf16.msra.mxu0 0
      %1210 = vmatprep.subr.bf16.mxu0 0
      %1211 = vmatpush1.bf16.msra.mxu0 0
      %1212 = vmatprep.mubr.bf16.mxu0 0
      %1213 = vmatmul.mubr.bf16.gmra.mrb[0].mxu0 %v1178
      %v1214 = vpop.f32.mrb[0].mxu0
      %v1215 = vadd.f32 0.0, %v1214
      %v1216 = vpop.f32.mrb[0].mxu0
      %v1217 = vpop.f32.mrb[0].mxu0
      %v1218 = vpop.f32.mrb[0].mxu0
      %1219 = vdwg.mxu0
      %v1220 = vadd.f32 %v602, %v1215
      %v1221 = vld [vmem:[%s530] sm:$0x1]
      %v1222 = vsel %vm609, %v1220, 0.0
      %1223 = vadd.xlane.f32.xlu0 %v1222
      %v1224 = vpop.xlane.xlu0 %1223
      %v1225 = vmul.f32 %v1224, %v613
      %v1226 = vsub.f32 %v1220, %v1225
      %v1227 = vmul.f32 %v1226, %v1226
      %v1228 = vsel %vm609, %v1227, 0.0
      %1229 = vadd.xlane.f32.xlu0 %v1228
      %v1230 = vpop.xlane.xlu0 %1229
      %v1231 = vmul.f32 %v1230, %v613
      %v1232 = vadd.f32 %v1231, 1e-05
      %v1233 = vrsqrt.pop %v1232
      %v1234 = vmul.f32 %v1226, %v1233
      %v1236 = vlaneseq
      %v1237 = vshrl.u32 %v1236, 7
      %v1238 = vsub.s32 0, %v1237
      %v1239 = vrot.slane %v1221, %v1238
      %v1241 = vmul.f32 %v1234, %v1239
      %v1242 = vpack.c.bf16 %v1241, %v1241
      %v1243 = vld [vmem:[%s535] sm:$0xf]
      %v1244 = vld [vmem:[%s535 + $0x4] sm:$0xf]
      %v1245 = vld [vmem:[%s535 + $0x8] sm:$0xf]
      %v1246 = vld [vmem:[%s535 + $0xc] sm:$0xf]
      %v1251 = vunpack.c.l.b16 %v1243
      %v1252 = vunpack.c.l.b16 %v1244
      %v1253 = vunpack.c.l.b16 %v1245
      %v1254 = vunpack.c.l.b16 %v1246
      %v1255 = vpack.c.b16 %v1252, %v1251
      %v1256 = vpack.c.b16 %v1254, %v1253
      %v1260 = vsel %vm609, %v1242, 0
      %1262 = vmatprep.subr.bf16.mxu0 0
      %1263 = vmatpush1.bf16.msra.mxu0 %v1255
      %1264 = vmatprep.subr.bf16.mxu0 0
      %1265 = vmatpush1.bf16.msra.mxu0 %v1256
      %1266 = vmatprep.subr.bf16.mxu0 0
      %1267 = vmatpush1.bf16.msra.mxu0 0
      %1268 = vmatprep.subr.bf16.mxu0 0
      %1269 = vmatpush1.bf16.msra.mxu0 0
      %1270 = vmatprep.subr.bf16.mxu0 0
      %1271 = vmatpush1.bf16.msra.mxu0 0
      %1272 = vmatprep.subr.bf16.mxu0 0
      %1273 = vmatpush1.bf16.msra.mxu0 0
      %1274 = vmatprep.subr.bf16.mxu0 0
      %1275 = vmatpush1.bf16.msra.mxu0 0
      %1276 = vmatprep.subr.bf16.mxu0 0
      %1277 = vmatpush1.bf16.msra.mxu0 0
      %1278 = vmatprep.subr.bf16.mxu0 0
      %1279 = vmatpush1.bf16.msra.mxu0 0
      %1280 = vmatprep.subr.bf16.mxu0 0
      %1281 = vmatpush1.bf16.msra.mxu0 0
      %1282 = vmatprep.subr.bf16.mxu0 0
      %1283 = vmatpush1.bf16.msra.mxu0 0
      %1284 = vmatprep.subr.bf16.mxu0 0
      %1285 = vmatpush1.bf16.msra.mxu0 0
      %1286 = vmatprep.subr.bf16.mxu0 0
      %1287 = vmatpush1.bf16.msra.mxu0 0
      %1288 = vmatprep.subr.bf16.mxu0 0
      %1289 = vmatpush1.bf16.msra.mxu0 0
      %1290 = vmatprep.subr.bf16.mxu0 0
      %1291 = vmatpush1.bf16.msra.mxu0 0
      %1292 = vmatprep.subr.bf16.mxu0 0
      %1293 = vmatpush1.bf16.msra.mxu0 0
      %1294 = vmatprep.mubr.bf16.mxu0 0
      %1295 = vmatmul.mubr.bf16.gmra.mrb[0].mxu0 %v1260
      %v1296 = vpop.f32.mrb[0].mxu0
      %v1297 = vadd.f32 0.0, %v1296
      %v1298 = vpop.f32.mrb[0].mxu0
      %v1299 = vpop.f32.mrb[0].mxu0
      %v1300 = vpop.f32.mrb[0].mxu0
      %1301 = vdwg.mxu0
      %v1302 = vmul.f32 %v1297, 0.5
      %v1303 = vmul.f32 %v1297, 0.044715
      %v1304 = vmul.f32 %v1303, %v1297
      %v1305 = vmul.f32 %v1304, %v1297
      %v1306 = vadd.f32 %v1297, %v1305
      %v1307 = vmul.f32 %v1306, 0.7978846
      %v1308 = vtanh.pop %v1307
      %v1309 = vadd.f32 %v1308, 1.0
      %v1310 = vmul.f32 %v1302, %v1309
      %v1311 = vpack.c.bf16 %v1310, %v1310
      %v1312 = vld [vmem:[%s540] sm:$0xf]
      %v1313 = vld [vmem:[%s540 + $0x4] sm:$0xf]
      %v1314 = vld [vmem:[%s540 + $0x8] sm:$0xf]
      %v1315 = vld [vmem:[%s540 + $0xc] sm:$0xf]
      %v1316 = vld [vmem:[%s540 + $0x10] sm:$0xf]
      %v1317 = vld [vmem:[%s540 + $0x14] sm:$0xf]
      %v1318 = vld [vmem:[%s540 + $0x18] sm:$0xf]
      %v1319 = vld [vmem:[%s540 + $0x1c] sm:$0xf]
      %v1320 = vld [vmem:[%s540 + $0x20] sm:$0xf]
      %v1321 = vld [vmem:[%s540 + $0x24] sm:$0xf]
      %v1322 = vld [vmem:[%s540 + $0x28] sm:$0xf]
      %v1323 = vld [vmem:[%s540 + $0x2c] sm:$0xf]
      %v1324 = vld [vmem:[%s540 + $0x30] sm:$0xf]
      %v1325 = vld [vmem:[%s540 + $0x34] sm:$0xf]
      %v1326 = vld [vmem:[%s540 + $0x38] sm:$0xf]
      %v1327 = vld [vmem:[%s540 + $0x3c] sm:$0xf]
      %v1344 = vunpack.c.l.b16 %v1312
      %v1345 = vunpack.c.l.b16 %v1313
      %v1346 = vunpack.c.l.b16 %v1314
      %v1347 = vunpack.c.l.b16 %v1315
      %v1348 = vunpack.c.l.b16 %v1316
      %v1349 = vunpack.c.l.b16 %v1317
      %v1350 = vunpack.c.l.b16 %v1318
      %v1351 = vunpack.c.l.b16 %v1319
      %v1352 = vunpack.c.l.b16 %v1320
      %v1353 = vunpack.c.l.b16 %v1321
      %v1354 = vunpack.c.l.b16 %v1322
      %v1355 = vunpack.c.l.b16 %v1323
      %v1356 = vunpack.c.l.b16 %v1324
      %v1357 = vunpack.c.l.b16 %v1325
      %v1358 = vunpack.c.l.b16 %v1326
      %v1359 = vunpack.c.l.b16 %v1327
      %v1360 = vpack.c.b16 %v1345, %v1344
      %v1361 = vpack.c.b16 %v1347, %v1346
      %v1362 = vpack.c.b16 %v1349, %v1348
      %v1363 = vpack.c.b16 %v1351, %v1350
      %v1364 = vpack.c.b16 %v1353, %v1352
      %v1365 = vpack.c.b16 %v1355, %v1354
      %v1366 = vpack.c.b16 %v1357, %v1356
      %v1367 = vpack.c.b16 %v1359, %v1358
      %1376 = vmatprep.subr.bf16.mxu0 0
      %1377 = vmatpush1.bf16.msra.mxu0 %v1360
      %1378 = vmatprep.subr.bf16.mxu0 0
      %1379 = vmatpush1.bf16.msra.mxu0 %v1361
      %1380 = vmatprep.subr.bf16.mxu0 0
      %1381 = vmatpush1.bf16.msra.mxu0 %v1362
      %1382 = vmatprep.subr.bf16.mxu0 0
      %1383 = vmatpush1.bf16.msra.mxu0 %v1363
      %1384 = vmatprep.subr.bf16.mxu0 0
      %1385 = vmatpush1.bf16.msra.mxu0 %v1364
      %1386 = vmatprep.subr.bf16.mxu0 0
      %1387 = vmatpush1.bf16.msra.mxu0 %v1365
      %1388 = vmatprep.subr.bf16.mxu0 0
      %1389 = vmatpush1.bf16.msra.mxu0 %v1366
      %1390 = vmatprep.subr.bf16.mxu0 0
      %1391 = vmatpush1.bf16.msra.mxu0 %v1367
      %1392 = vmatprep.subr.bf16.mxu0 0
      %1393 = vmatpush1.bf16.msra.mxu0 0
      %1394 = vmatprep.subr.bf16.mxu0 0
      %1395 = vmatpush1.bf16.msra.mxu0 0
      %1396 = vmatprep.subr.bf16.mxu0 0
      %1397 = vmatpush1.bf16.msra.mxu0 0
      %1398 = vmatprep.subr.bf16.mxu0 0
      %1399 = vmatpush1.bf16.msra.mxu0 0
      %1400 = vmatprep.subr.bf16.mxu0 0
      %1401 = vmatpush1.bf16.msra.mxu0 0
      %1402 = vmatprep.subr.bf16.mxu0 0
      %1403 = vmatpush1.bf16.msra.mxu0 0
      %1404 = vmatprep.subr.bf16.mxu0 0
      %1405 = vmatpush1.bf16.msra.mxu0 0
      %1406 = vmatprep.subr.bf16.mxu0 0
      %1407 = vmatpush1.bf16.msra.mxu0 0
      %1408 = vmatprep.mubr.bf16.mxu0 0
      %1409 = vmatmul.mubr.bf16.gmra.mrb[0].mxu0 %v1311
      %v1410 = vpop.f32.mrb[0].mxu0
      %v1411 = vadd.f32 0.0, %v1410
      %v1412 = vpop.f32.mrb[0].mxu0
      %v1413 = vpop.f32.mrb[0].mxu0
      %v1414 = vpop.f32.mrb[0].mxu0
      %1415 = vdwg.mxu0
      %v1416 = vadd.f32 %v1220, %v1411
      %1417 = vst.msk [vmem:[#allocation2] sm:$0xff] %vm609, %v1416
      %p1418 = scmp.eq.s32.totalorder %s28, 1
      // Predicated region
      $region73: #{tpu_custom_call.1} parent=67 // pred_check
        %p1419 = pneg %p1418
      $region74: #{tpu_custom_call.1} parent=67 // pred_check_branch
        %1421 = sbr.rel (%p1419) target = $region76
      $region75: #{tpu_custom_call.1} parent=67 // pred_region
        %v1422 = vld [vmem:[%s10] sm:$0x1]
        %v1423 = vsel %vm609, %v1416, 0.0
        %1424 = vadd.xlane.f32.xlu0 %v1423
        %v1425 = vpop.xlane.xlu0 %1424
        %v1426 = vmul.f32 %v1425, %v613
        %v1427 = vsub.f32 %v1416, %v1426
        %v1428 = vmul.f32 %v1427, %v1427
        %v1429 = vsel %vm609, %v1428, 0.0
        %1430 = vadd.xlane.f32.xlu0 %v1429
        %v1431 = vpop.xlane.xlu0 %1430
        %v1432 = vmul.f32 %v1431, %v613
        %v1433 = vadd.f32 %v1432, 1e-05
        %v1434 = vrsqrt.pop %v1433
        %v1435 = vmul.f32 %v1427, %v1434
        %v1437 = vlaneseq
        %v1438 = vshrl.u32 %v1437, 7
        %v1439 = vsub.s32 0, %v1438
        %v1440 = vrot.slane %v1422, %v1439
        %v1442 = vmul.f32 %v1435, %v1440
        %v1443 = vpack.c.bf16 %v1442, %v1442
        %v1444 = vld [vmem:[%s11] sm:$0xf]
        %v1445 = vld [vmem:[%s11 + $0x4] sm:$0xf]
        %v1446 = vld [vmem:[%s11 + $0x8] sm:$0xf]
        %v1447 = vld [vmem:[%s11 + $0xc] sm:$0xf]
        %v1452 = vunpack.c.l.b16 %v1444
        %v1453 = vunpack.c.l.b16 %v1445
        %v1454 = vunpack.c.l.b16 %v1446
        %v1455 = vunpack.c.l.b16 %v1447
        %v1456 = vpack.c.b16 %v1453, %v1452
        %v1457 = vpack.c.b16 %v1455, %v1454
        %v1461 = vsel %vm609, %v1443, 0
        %1463 = vmatprep.subr.bf16.mxu0 0
        %1464 = vmatpush1.bf16.msra.mxu0 %v1456
        %1465 = vmatprep.subr.bf16.mxu0 0
        %1466 = vmatpush1.bf16.msra.mxu0 %v1457
        %1467 = vmatprep.subr.bf16.mxu0 0
        %1468 = vmatpush1.bf16.msra.mxu0 0
        %1469 = vmatprep.subr.bf16.mxu0 0
        %1470 = vmatpush1.bf16.msra.mxu0 0
        %1471 = vmatprep.subr.bf16.mxu0 0
        %1472 = vmatpush1.bf16.msra.mxu0 0
        %1473 = vmatprep.subr.bf16.mxu0 0
        %1474 = vmatpush1.bf16.msra.mxu0 0
        %1475 = vmatprep.subr.bf16.mxu0 0
        %1476 = vmatpush1.bf16.msra.mxu0 0
        %1477 = vmatprep.subr.bf16.mxu0 0
        %1478 = vmatpush1.bf16.msra.mxu0 0
        %1479 = vmatprep.subr.bf16.mxu0 0
        %1480 = vmatpush1.bf16.msra.mxu0 0
        %1481 = vmatprep.subr.bf16.mxu0 0
        %1482 = vmatpush1.bf16.msra.mxu0 0
        %1483 = vmatprep.subr.bf16.mxu0 0
        %1484 = vmatpush1.bf16.msra.mxu0 0
        %1485 = vmatprep.subr.bf16.mxu0 0
        %1486 = vmatpush1.bf16.msra.mxu0 0
        %1487 = vmatprep.subr.bf16.mxu0 0
        %1488 = vmatpush1.bf16.msra.mxu0 0
        %1489 = vmatprep.subr.bf16.mxu0 0
        %1490 = vmatpush1.bf16.msra.mxu0 0
        %1491 = vmatprep.subr.bf16.mxu0 0
        %1492 = vmatpush1.bf16.msra.mxu0 0
        %1493 = vmatprep.subr.bf16.mxu0 0
        %1494 = vmatpush1.bf16.msra.mxu0 0
        %1495 = vmatprep.mubr.bf16.mxu0 0
        %1496 = vmatmul.mubr.bf16.gmra.mrb[0].mxu0 %v1461
        %v1497 = vpop.f32.mrb[0].mxu0
        %v1498 = vadd.f32 0.0, %v1497
        %v1499 = vpop.f32.mrb[0].mxu0
        %v1500 = vpop.f32.mrb[0].mxu0
        %v1501 = vpop.f32.mrb[0].mxu0
        %1502 = vdwg.mxu0
        %v1503 = vld [vmem:[%s514] sm:$0xff]
        %v1504 = vsub.f32 %v1498, %v1503
        %v1505 = vmul.f32 %v1504, %v1504
        %vm1506 = vcmask 31744
        %v1507 = vsel %vm1506, %v1505, 0.0
        %1508 = vadd.xlane.f32.xlu0 %v1507
        %v1509 = vpop.xlane.xlu0 %1508
        %v1510 = vrot.slane %v1509, 4
        %v1511 = vadd.f32 %v1509, %v1510
        %v1512 = vrot.slane %v1511, 2
        %v1513 = vadd.f32 %v1511, %v1512
        %v1514 = vrot.slane %v1513, 1
        %v1515 = vadd.f32 %v1513, %v1514
        %s1516 = vtos %v1515
        %v1517 = vstv %s1516
        %vm1518 = vcmask 0
        %1519 = vst.msk [vmem:[%s543] sm:$0x1] %vm1518, %v1517
      $region76: #{tpu_custom_call.1} parent=67 // pred_fallthru
        _
      %p1520 = scmp.lt.s32.totalorder %s27, 1
      %s1521 = scalar_select %p1520, %s27, 1
      %s1522 = scalar_lea.vmem %s12, %s1521
      // Predicated region
      $region77: #{tpu_custom_call.1} parent=67 // pred_check
        %p1523 = pneg %p345
      $region78: #{tpu_custom_call.1} parent=67 // pred_check_branch
        %1525 = sbr.rel (%p1523) target = $region80
      $region79: #{tpu_custom_call.1} parent=67 // pred_region
        _
      $region80: #{tpu_custom_call.1} parent=67 // pred_fallthru
        _
    $region68: #{tpu_custom_call.1} parent=5 // pred_fallthru
      _
    %p1526 = scmp.le.s32.totalorder 2, %s18
    // Predicated region
    $region81: #{tpu_custom_call.1} parent=5 // pred_check
      %p1527 = pneg %p1526
    $region82: #{tpu_custom_call.1} parent=5 // pred_check_branch
      %1529 = sbr.rel (%p1527) target = $region84
    $region83: #{tpu_custom_call.1} parent=5 // pred_region
      %s1530 = ssub.s32 %s18, 2
      // Predicated region
      $region85: #{tpu_custom_call.1} parent=83 // pred_check
        %p1531 = pneg %p351
      $region86: #{tpu_custom_call.1} parent=83 // pred_check_branch
        %1533 = sbr.rel (%p1531) target = $region88
      $region87: #{tpu_custom_call.1} parent=83 // pred_region
        %p1534 = scmp.lt.s32.totalorder %s29, 1
        %s1535 = scalar_select %p1534, %s29, 1
        %s1536 = scalar_lea.vmem %s12, %s1535
      $region88: #{tpu_custom_call.1} parent=83 // pred_fallthru
        _
    $region84: #{tpu_custom_call.1} parent=5 // pred_fallthru
      _
  $region6: #{tpu_custom_call.1} parent=0 // loop_footer
    %s22 = sadd.s32 1, %s18
  $region7: #{tpu_custom_call.1} parent=0 // loop_footer_branch
    %17 = sbr.rel target = $region3
  $region8: #{tpu_custom_call.1} parent=0 // loop_exit
    _

</llo_original>
